<compile_context>
chip_gen: v5e
topology: v5e:2x2
jax: 0.10.0
libtpu: 0.0.40
codegen_flags: <defaults>
</compile_context>

<pallas_src>
import functools

import jax
import jax.numpy as jnp
import numpy as np
from jax.experimental import pallas as pl
from jax.experimental.pallas import tpu as pltpu


def _round_up(x, m):
    return ((x + m - 1) // m) * m


def _edge_att_kernel(lens_ref, x_ref, wt_ref, out_ref, *, wp, wf, t_pad, d_pad,
                     mxu_dtype):
    """One grid step handles a block of B_BLK dialogues.

    lens_ref : (B_BLK, 1, 1)         int32   dialogue lengths
    x_ref    : (B_BLK, T_pad, G_pad) float32 node features (zero padded)
    wt_ref   : (G_pad, G_pad)        float32 weight, pre-transposed (W^T)
    out_ref  : (B_BLK, T_pad, D_pad) float32 alphas (lane-dense padded)
    """
    b_blk, _, g_pad = x_ref.shape

    x = x_ref[...]
    wt = wt_ref[...]
    xm = x if mxu_dtype is None else x.astype(mxu_dtype)
    wtm = wt if mxu_dtype is None else wt.astype(mxu_dtype)

    # att[b, k, :] = W @ x[b, k, :] == x @ W^T; fold the whole batch block into
    # a single (B_BLK*T_pad, G_pad) x (G_pad, G_pad) MXU matmul, no transposes.
    att = jnp.dot(
        xm.reshape(b_blk * t_pad, g_pad), wtm,
        preferred_element_type=jnp.float32,
    ).reshape(b_blk, t_pad, g_pad)
    attm = att if mxu_dtype is None else att.astype(mxu_dtype)

    # scores[b, j, k] = x[b, j, :] . att[b, k, :] == x_j^T W x_k
    scores = jnp.einsum(
        "bqg,bkg->bqk", xm, attm, preferred_element_type=jnp.float32
    )  # (B_BLK, T_pad, T_pad)

    # Window + length mask: j < len_b and max(0, j-wp) <= k <= min(j+wf, len_b-1)
    cur = lens_ref[...]                                    # (B_BLK, 1, 1) int32
    j_idx = jax.lax.broadcasted_iota(jnp.int32, (b_blk, t_pad, t_pad), 1)
    k_idx = jax.lax.broadcasted_iota(jnp.int32, (b_blk, t_pad, t_pad), 2)
    lo = jnp.maximum(j_idx - wp, 0)
    hi = jnp.minimum(j_idx + wf, cur - 1)
    valid = (k_idx >= lo) & (k_idx <= hi) & (j_idx < cur)

    # Masked softmax along k; rows with no valid entries come out exactly zero.
    masked = jnp.where(valid, scores, jnp.float32(-1e30))
    m = jnp.max(masked, axis=-1, keepdims=True)
    ex = jnp.exp(masked - m) * valid.astype(jnp.float32)
    denom = jnp.sum(ex, axis=-1, keepdims=True)
    denom = jnp.where(denom == 0.0, jnp.float32(1.0), denom)
    probs = (ex * pl.reciprocal(denom, approx=False)).astype(out_ref.dtype)

    if d_pad > t_pad:
        out_ref[:, :, :t_pad] = probs           # lane-aligned: t_pad % 128 == 0
        out_ref[:, :, t_pad:] = jnp.zeros(
            (b_blk, t_pad, d_pad - t_pad), out_ref.dtype)
    else:
        out_ref[...] = probs


def edge_att_forward(node_features, text_len, weight, *, wp, wf,
                     max_dialogue_len, b_blk=8, mxu_dtype=None):
    """EdgeAtt.forward. Returns stacked alphas (B, mx_len, max_dialogue_len) f32.

    mxu_dtype=jnp.bfloat16 casts the two MXU matmuls to bf16 (faster on
    v6e/v7x); keep None (f32) when ~1e-5 agreement with the torch reference is
    required.  As in the torch module, max_dialogue_len is assumed to cover the
    longest dialogue (otherwise torch itself would error on the alpha write).
    """
    B, mx_len, g_dim = node_features.shape

    # Lane-dense padding (multiples of 128) -> unmasked vector stores and full
    # MXU tiles; padded rows/cols are exact zeros and are sliced off below.
    t_pad = _round_up(mx_len, 128)
    g_pad = _round_up(g_dim, 128)
    d_pad = _round_up(max(max_dialogue_len, mx_len), 128)

    b_blk = max(1, min(b_blk, B))
    b_pad = _round_up(B, b_blk)
    num_blocks = b_pad // b_blk

    x_pad = jnp.pad(
        node_features.astype(jnp.float32),
        ((0, b_pad - B), (0, t_pad - mx_len), (0, g_pad - g_dim)))
    # Pre-transposed weight: the projection contracts x's last dim with wt's
    # first dim, so no in-kernel transpose / relayout is needed.
    wt_pad = jnp.pad(
        weight.astype(jnp.float32).T,
        ((0, g_pad - g_dim), (0, g_pad - g_dim)))
    lens = jnp.zeros((b_pad,), jnp.int32).at[:B].set(text_len.astype(jnp.int32))
    lens = lens.reshape(b_pad, 1, 1)

    kernel = functools.partial(
        _edge_att_kernel, wp=wp, wf=wf, t_pad=t_pad, d_pad=d_pad,
        mxu_dtype=mxu_dtype)

    out_pad = pl.pallas_call(
        kernel,
        out_shape=jax.ShapeDtypeStruct((b_pad, t_pad, d_pad), jnp.float32),
        grid=(num_blocks,),
        in_specs=[
            pl.BlockSpec((b_blk, 1, 1), lambda i: (i, 0, 0)),
            pl.BlockSpec((b_blk, t_pad, g_pad), lambda i: (i, 0, 0)),
            # Constant block index -> the pipeliner only fetches W once.
            pl.BlockSpec((g_pad, g_pad), lambda i: (0, 0)),
        ],
        out_specs=pl.BlockSpec((b_blk, t_pad, d_pad), lambda i: (i, 0, 0)),
        compiler_params=pltpu.CompilerParams(
            # Independent batch blocks -> shard across TensorCores (2x on v7x).
            dimension_semantics=("parallel",)),
    )(lens, x_pad, wt_pad)

    return out_pad[:B, :mx_len, :max_dialogue_len]


def _reference_numpy(node_features, text_len, weight, wp, wf, max_dlen):
    x = np.asarray(node_features, dtype=np.float32)
    W = np.asarray(weight, dtype=np.float32)
    lens = np.asarray(text_len)
    B, T, _ = x.shape
    out = np.zeros((B, T, max_dlen), dtype=np.float32)
    for i in range(B):
        L = int(lens[i])
        att = x[i] @ W.T                       # att[k] = W @ x[i, k]
        for j in range(L):
            s = max(0, j - wp)
            e = min(j + wf, L - 1)
            score = att[s:e + 1] @ x[i, j]
            score = score - score.max()
            p = np.exp(score)
            p = p / p.sum()
            out[i, j, s:e + 1] = p
    return out


if __name__ == "__main__":
    key = jax.random.PRNGKey(0)

    # --- case 1: small, module-consistent shapes (whole batch in one step) ---
    B, mx_len, g_dim = 2, 16, 32
    wp, wf, mdl = 2, 2, 32
    k_x, k_w, key = jax.random.split(key, 3)
    x = jax.random.normal(k_x, (B, mx_len, g_dim), dtype=jnp.float32)
    var = 2.0 / (g_dim + g_dim)   # same init scale as the torch module
    w = jax.random.normal(k_w, (g_dim, g_dim), dtype=jnp.float32) * var
    text_len = jnp.array([12, 7], dtype=jnp.int32)

    out = edge_att_forward(x, text_len, w, wp=wp, wf=wf, max_dialogue_len=mdl)
    out = jax.block_until_ready(out)
    ref = _reference_numpy(x, text_len, w, wp, wf, mdl)
    np.testing.assert_allclose(np.asarray(out), ref, rtol=1e-5, atol=1e-5)

    # --- case 2: batch > block (padded batch, grid of 2), odd sizes, and
    #             max_dialogue_len larger than the padded seq width -----------
    B, mx_len, g_dim = 10, 21, 24
    wp, wf, mdl = 3, 1, 200
    k_x, k_w, key = jax.random.split(key, 3)
    x = jax.random.normal(k_x, (B, mx_len, g_dim), dtype=jnp.float32)
    var = 2.0 / (g_dim + g_dim)
    w = jax.random.normal(k_w, (g_dim, g_dim), dtype=jnp.float32) * var
    text_len = jnp.array([21, 1, 5, 13, 21, 2, 8, 17, 20, 3], dtype=jnp.int32)

    out = edge_att_forward(x, text_len, w, wp=wp, wf=wf, max_dialogue_len=mdl)
    out = jax.block_until_ready(out)
    ref = _reference_numpy(x, text_len, w, wp, wf, mdl)
    np.testing.assert_allclose(np.asarray(out), ref, rtol=1e-5, atol=1e-5)

    print("KERNEL_OK")
</pallas_src>

<mosaic_0001>
module attributes {stable_mosaic.version = 11 : i64} {
  func.func @_edge_att_kernel(%arg0: i32, %arg1: memref<2x1x1xi32, #tpu.memory_space<vmem>>, %arg2: memref<2x128x128xf32, #tpu.memory_space<vmem>>, %arg3: memref<128x128xf32, #tpu.memory_space<vmem>>, %arg4: memref<2x128x128xf32, #tpu.memory_space<vmem>>) attributes {dimension_semantics = [#tpu.dimension_semantics<parallel>], iteration_bounds = array<i64: 1>, scalar_prefetch = 0 : i64, scratch_operands = 0 : i64, tpu.core_type = #tpu.core_type<tc>, window_params = [{transform_indices = @transform_0, window_bounds = array<i64: 2, 1, 1>}, {transform_indices = @transform_1, window_bounds = array<i64: 2, 128, 128>}, {pipeline_mode = #tpu.pipeline_mode<synchronous>, transform_indices = @transform_2, window_bounds = array<i64: 128, 128>}, {transform_indices = @transform_3, window_bounds = array<i64: 2, 128, 128>}]} {
    %c0 = arith.constant 0 : index
    %c0_0 = arith.constant 0 : index
    %c0_1 = arith.constant 0 : index
    %0 = vector.load %arg2[%c0, %c0_0, %c0_1] : memref<2x128x128xf32, #tpu.memory_space<vmem>>, vector<2x128x128xf32>
    %c0_2 = arith.constant 0 : index
    %c0_3 = arith.constant 0 : index
    %1 = vector.load %arg3[%c0_2, %c0_3] : memref<128x128xf32, #tpu.memory_space<vmem>>, vector<128x128xf32>
    %2 = vector.shape_cast %0 : vector<2x128x128xf32> to vector<256x128xf32>
    %cst = arith.constant dense<0.000000e+00> : vector<256x128xf32>
    %3 = tpu.matmul %2, %1, %cst {dimension_numbers = #tpu.dot_dimension_numbers<[1], [0], [0], [1], [0, 0, 1, 1], [], []>} : vector<256x128xf32>, vector<128x128xf32>, vector<256x128xf32> -> vector<256x128xf32>
    %4 = vector.shape_cast %3 : vector<256x128xf32> to vector<2x128x128xf32>
    "tpu.trace_start"() <{level = 10 : i32, message = "bqg,bkg->bqk"}> : () -> ()
    %cst_4 = arith.constant dense<0.000000e+00> : vector<2x128x128xf32>
    %5 = tpu.matmul %0, %4, %cst_4 {dimension_numbers = #tpu.dot_dimension_numbers<[2], [2], [1], [1], [0, 0, 0, 1, 1, 1], [0], [0]>} : vector<2x128x128xf32>, vector<2x128x128xf32>, vector<2x128x128xf32> -> vector<2x128x128xf32>
    "tpu.trace_stop"() : () -> ()
    %c0_5 = arith.constant 0 : index
    %c0_6 = arith.constant 0 : index
    %c0_7 = arith.constant 0 : index
    %6 = vector.load %arg1[%c0_5, %c0_6, %c0_7] : memref<2x1x1xi32, #tpu.memory_space<vmem>>, vector<2x1x1xi32>
    %7 = tpu.iota {dimensions = array<i32: 1>} : vector<2x128x128xi32>
    %8 = tpu.iota {dimensions = array<i32: 2>} : vector<2x128x128xi32>
    %c2_i32 = arith.constant 2 : i32
    %9 = vector.broadcast %c2_i32 : i32 to vector<2x128x128xi32>
    %10 = arith.subi %7, %9 : vector<2x128x128xi32>
    %c0_i32 = arith.constant 0 : i32
    %11 = vector.broadcast %c0_i32 : i32 to vector<2x128x128xi32>
    %12 = arith.maxsi %10, %11 : vector<2x128x128xi32>
    %c2_i32_8 = arith.constant 2 : i32
    %13 = vector.broadcast %c2_i32_8 : i32 to vector<2x128x128xi32>
    %14 = arith.addi %7, %13 : vector<2x128x128xi32>
    %c1_i32 = arith.constant 1 : i32
    %15 = vector.broadcast %c1_i32 : i32 to vector<2x1x1xi32>
    %16 = arith.subi %6, %15 : vector<2x1x1xi32>
    %17 = vector.broadcast %16 : vector<2x1x1xi32> to vector<2x128x128xi32>
    %18 = arith.minsi %14, %17 : vector<2x128x128xi32>
    %19 = arith.cmpi sge, %8, %12 : vector<2x128x128xi32>
    %20 = arith.cmpi sle, %8, %18 : vector<2x128x128xi32>
    %21 = arith.andi %19, %20 : vector<2x128x128xi1>
    %22 = vector.broadcast %6 : vector<2x1x1xi32> to vector<2x128x128xi32>
    %23 = arith.cmpi slt, %7, %22 : vector<2x128x128xi32>
    %24 = arith.andi %21, %23 : vector<2x128x128xi1>
    %cst_9 = arith.constant -1.000000e+30 : f32
    %25 = vector.broadcast %cst_9 : f32 to vector<2x128x128xf32>
    %26 = arith.select %24, %5, %25 : vector<2x128x128xi1>, vector<2x128x128xf32>
    %cst_10 = arith.constant dense<0xFF800000> : vector<2x128xf32>
    %27 = vector.multi_reduction <maximumf>, %26, %cst_10 [2] : vector<2x128x128xf32> to vector<2x128xf32>
    %28 = vector.shape_cast %27 : vector<2x128xf32> to vector<2x128x1xf32>
    %29 = vector.broadcast %28 : vector<2x128x1xf32> to vector<2x128x128xf32>
    %30 = arith.subf %26, %29 : vector<2x128x128xf32>
    %31 = math.exp %30 : vector<2x128x128xf32>
    %32 = arith.extui %24 : vector<2x128x128xi1> to vector<2x128x128xi32>
    %33 = arith.sitofp %32 : vector<2x128x128xi32> to vector<2x128x128xf32>
    %34 = arith.mulf %31, %33 : vector<2x128x128xf32>
    %cst_11 = arith.constant dense<0.000000e+00> : vector<2x128xf32>
    %35 = vector.multi_reduction <add>, %34, %cst_11 [2] : vector<2x128x128xf32> to vector<2x128xf32>
    %36 = vector.shape_cast %35 : vector<2x128xf32> to vector<2x128x1xf32>
    %cst_12 = arith.constant 0.000000e+00 : f32
    %37 = vector.broadcast %cst_12 : f32 to vector<2x128x1xf32>
    %38 = arith.cmpf oeq, %36, %37 : vector<2x128x1xf32>
    %cst_13 = arith.constant 1.000000e+00 : f32
    %39 = vector.broadcast %cst_13 : f32 to vector<2x128x1xf32>
    %40 = arith.select %38, %39, %36 : vector<2x128x1xi1>, vector<2x128x1xf32>
    %41 = tpu.reciprocal %40 : vector<2x128x1xf32> -> vector<2x128x1xf32>
    %42 = vector.broadcast %41 : vector<2x128x1xf32> to vector<2x128x128xf32>
    %43 = arith.mulf %34, %42 : vector<2x128x128xf32>
    %c0_14 = arith.constant 0 : index
    %c0_15 = arith.constant 0 : index
    %c0_16 = arith.constant 0 : index
    %44 = vector.load %arg4[%c0_14, %c0_15, %c0_16] : memref<2x128x128xf32, #tpu.memory_space<vmem>>, vector<2x128x128xf32>
    tpu.vector_store %arg4[%c0_14, %c0_15, %c0_16], %43 {strides = array<i32>} : memref<2x128x128xf32, #tpu.memory_space<vmem>>, vector<2x128x128xf32>,
    return
  }
  func.func @transform_0(%arg0: i32) -> (i32, i32, i32) {
    %c0_i32 = arith.constant 0 : i32
    %c0_i32_0 = arith.constant 0 : i32
    %c0_i32_1 = arith.constant 0 : i32
    return %arg0, %c0_i32, %c0_i32_0 : i32, i32, i32
  }
  func.func @transform_1(%arg0: i32) -> (i32, i32, i32) {
    %c0_i32 = arith.constant 0 : i32
    %c0_i32_0 = arith.constant 0 : i32
    %c0_i32_1 = arith.constant 0 : i32
    return %arg0, %c0_i32, %c0_i32_0 : i32, i32, i32
  }
  func.func @transform_2(%arg0: i32) -> (i32, i32) {
    %c0_i32 = arith.constant 0 : i32
    %c0_i32_0 = arith.constant 0 : i32
    %c0_i32_1 = arith.constant 0 : i32
    return %c0_i32, %c0_i32_0 : i32, i32
  }
  func.func @transform_3(%arg0: i32) -> (i32, i32, i32) {
    %c0_i32 = arith.constant 0 : i32
    %c0_i32_0 = arith.constant 0 : i32
    %c0_i32_1 = arith.constant 0 : i32
    return %arg0, %c0_i32, %c0_i32_0 : i32, i32, i32
  }
}

</mosaic_0001>

<llo_original>
// kernel: tpu_custom_call.1
$region0: #{tpu_custom_call.1}
  #allocation0 [shape = 'u32[]', space=smem, size = 0x4, offset = 0x4, fixed_abs, tag = 'smem constant byte address 0x4 - core index']
  #allocation1 [shape = 'u32[72,128]{1,0:T(1,128)}', space=vmem, size = 0x9000, scoped, tag = 'internal scratch']
  %s0 = inlined_call_operand.vmem [shape: s32[2,1,1], index: 0, kind: input, shape index: {}]
  %s1 = inlined_call_operand.hbm [shape: f32[2,128,128], index: 1, kind: input, shape index: {}]
  %s2 = inlined_call_operand.hbm [shape: f32[128,128], index: 2, kind: input, shape index: {}]
  %s3 = inlined_call_operand.hbm [shape: f32[2,128,128], index: 3, kind: output, shape index: {}]
  %s4 = sld [smem:[#allocation0]]
  $region30: #{tpu_custom_call.1} parent=0
    _
  %s6 = ssub.s32 1, %s4
  %s7 = scalar_select 0, %s6, %s4
  $region1: #{tpu_custom_call.1} parent=0
    #allocation2 [shape = 'u8[131072]{0}', space=vmem, size = 0x20000, scoped, tag = 'input window, operand 1, single buffered']
    #allocation3 [shape = 's32[1]{0}', space=sflag, size = 0x4, scoped, tag = 'scoped memory for tpu_custom_call.1']
    #allocation4 [shape = 's32[1]{0}', space=sflag, size = 0x4, scoped, tag = 'scoped memory for tpu_custom_call.1']
    #allocation5 [shape = 'u8[65536]{0}', space=vmem, size = 0x10000, scoped, tag = 'input window, operand 2, single buffered']
    #allocation6 [shape = 's32[1]{0}', space=sflag, size = 0x4, scoped, tag = 'scoped memory for tpu_custom_call.1']
    #allocation7 [shape = 'u8[131072]{0}', space=vmem, size = 0x20000, scoped, tag = 'output window, operand 0, single buffered']
    %8 = vsyncpa [#allocation3], 0
    %9 = vsyncpa [#allocation6], 0
    %10 = vsyncpa [#allocation4], 0
    // Predicated region
    $region2: #{tpu_custom_call.1} parent=1 // pred_check
      _
    $region3: #{tpu_custom_call.1} parent=1 // pred_check_branch
      %12 = sbr.rel (0) target = $region5
    $region4: #{tpu_custom_call.1} parent=1 // pred_region
      _
    $region5: #{tpu_custom_call.1} parent=1 // pred_fallthru
      _
    // Predicated region
    $region6: #{tpu_custom_call.1} parent=1 // pred_check
      _
    $region7: #{tpu_custom_call.1} parent=1 // pred_check_branch
      %14 = sbr.rel (0) target = $region9
    $region8: #{tpu_custom_call.1} parent=1 // pred_region
      %16 = vsyncadd [#allocation3], 0
      %s17 = sshll.u32 %s1, 4
      %s18 = int_to_ptr.hbm [resolvable:$true] %s17
      %s19 = sshll.u32 [#allocation2], 4
      %s20 = int_to_ptr.vmem [resolvable:$true] %s19
      %25 = dma.hbm_to_vmem [thread:$0]  %s18, 4096, %s20, [#allocation3], 128, 128, 8
    $region9: #{tpu_custom_call.1} parent=1 // pred_fallthru
      _
    // Predicated region
    $region10: #{tpu_custom_call.1} parent=1 // pred_check
      _
    $region11: #{tpu_custom_call.1} parent=1 // pred_check_branch
      %27 = sbr.rel (0) target = $region13
    $region12: #{tpu_custom_call.1} parent=1 // pred_region
      %29 = vsyncadd [#allocation6], 0
      %s30 = sshll.u32 %s2, 4
      %s31 = int_to_ptr.hbm [resolvable:$true] %s30
      %s32 = sshll.u32 [#allocation5], 4
      %s33 = int_to_ptr.vmem [resolvable:$true] %s32
      %38 = dma.hbm_to_vmem [thread:$0]  %s31, 2048, %s33, [#allocation6], 128, 128, 8
    $region13: #{tpu_custom_call.1} parent=1 // pred_fallthru
      _
    // Predicated region
    $region14: #{tpu_custom_call.1} parent=1 // pred_check
      _
    $region15: #{tpu_custom_call.1} parent=1 // pred_check_branch
      %40 = sbr.rel (0) target = $region17
    $region16: #{tpu_custom_call.1} parent=1 // pred_region
      %42 = dma.done [#allocation3], 4096
    $region17: #{tpu_custom_call.1} parent=1 // pred_fallthru
      _
    // Predicated region
    $region18: #{tpu_custom_call.1} parent=1 // pred_check
      _
    $region19: #{tpu_custom_call.1} parent=1 // pred_check_branch
      %44 = sbr.rel (0) target = $region21
    $region20: #{tpu_custom_call.1} parent=1 // pred_region
      %46 = dma.done [#allocation6], 2048
    $region21: #{tpu_custom_call.1} parent=1 // pred_fallthru
      _
    %v47 = vld [vmem:[#allocation2] sm:$0xff]
    %v48 = vld [vmem:[#allocation2 + $0x8] sm:$0xff]
    %v49 = vld [vmem:[#allocation2 + $0x10] sm:$0xff]
    %v50 = vld [vmem:[#allocation2 + $0x18] sm:$0xff]
    %v51 = vld [vmem:[#allocation2 + $0x20] sm:$0xff]
    %v52 = vld [vmem:[#allocation2 + $0x28] sm:$0xff]
    %v53 = vld [vmem:[#allocation2 + $0x30] sm:$0xff]
    %v54 = vld [vmem:[#allocation2 + $0x38] sm:$0xff]
    %v55 = vld [vmem:[#allocation2 + $0x40] sm:$0xff]
    %v56 = vld [vmem:[#allocation2 + $0x48] sm:$0xff]
    %v57 = vld [vmem:[#allocation2 + $0x50] sm:$0xff]
    %v58 = vld [vmem:[#allocation2 + $0x58] sm:$0xff]
    %v59 = vld [vmem:[#allocation2 + $0x60] sm:$0xff]
    %v60 = vld [vmem:[#allocation2 + $0x68] sm:$0xff]
    %v61 = vld [vmem:[#allocation2 + $0x70] sm:$0xff]
    %v62 = vld [vmem:[#allocation2 + $0x78] sm:$0xff]
    %v63 = vld [vmem:[#allocation2 + $0x80] sm:$0xff]
    %v64 = vld [vmem:[#allocation2 + $0x88] sm:$0xff]
    %v65 = vld [vmem:[#allocation2 + $0x90] sm:$0xff]
    %v66 = vld [vmem:[#allocation2 + $0x98] sm:$0xff]
    %v67 = vld [vmem:[#allocation2 + $0xa0] sm:$0xff]
    %v68 = vld [vmem:[#allocation2 + $0xa8] sm:$0xff]
    %v69 = vld [vmem:[#allocation2 + $0xb0] sm:$0xff]
    %v70 = vld [vmem:[#allocation2 + $0xb8] sm:$0xff]
    %v71 = vld [vmem:[#allocation2 + $0xc0] sm:$0xff]
    %v72 = vld [vmem:[#allocation2 + $0xc8] sm:$0xff]
    %v73 = vld [vmem:[#allocation2 + $0xd0] sm:$0xff]
    %v74 = vld [vmem:[#allocation2 + $0xd8] sm:$0xff]
    %v75 = vld [vmem:[#allocation2 + $0xe0] sm:$0xff]
    %v76 = vld [vmem:[#allocation2 + $0xe8] sm:$0xff]
    %v77 = vld [vmem:[#allocation2 + $0xf0] sm:$0xff]
    %v78 = vld [vmem:[#allocation2 + $0xf8] sm:$0xff]
    %v79 = vld [vmem:[#allocation5] sm:$0xff]
    %v80 = vld [vmem:[#allocation5 + $0x8] sm:$0xff]
    %v81 = vld [vmem:[#allocation5 + $0x10] sm:$0xff]
    %v82 = vld [vmem:[#allocation5 + $0x18] sm:$0xff]
    %v83 = vld [vmem:[#allocation5 + $0x20] sm:$0xff]
    %v84 = vld [vmem:[#allocation5 + $0x28] sm:$0xff]
    %v85 = vld [vmem:[#allocation5 + $0x30] sm:$0xff]
    %v86 = vld [vmem:[#allocation5 + $0x38] sm:$0xff]
    %v87 = vld [vmem:[#allocation5 + $0x40] sm:$0xff]
    %v88 = vld [vmem:[#allocation5 + $0x48] sm:$0xff]
    %v89 = vld [vmem:[#allocation5 + $0x50] sm:$0xff]
    %v90 = vld [vmem:[#allocation5 + $0x58] sm:$0xff]
    %v91 = vld [vmem:[#allocation5 + $0x60] sm:$0xff]
    %v92 = vld [vmem:[#allocation5 + $0x68] sm:$0xff]
    %v93 = vld [vmem:[#allocation5 + $0x70] sm:$0xff]
    %v94 = vld [vmem:[#allocation5 + $0x78] sm:$0xff]
    %95 = vmatpush.msra.mxu0 %v94
    %96 = vmatpush.msra.mxu0 %v93
    %97 = vmatpush.msra.mxu0 %v92
    %98 = vmatpush.msra.mxu0 %v91
    %99 = vmatpush.msra.mxu0 %v90
    %100 = vmatpush.msra.mxu0 %v89
    %101 = vmatpush.msra.mxu0 %v88
    %102 = vmatpush.msra.mxu0 %v87
    %103 = vmatpush.msra.mxu0 %v86
    %104 = vmatpush.msra.mxu0 %v85
    %105 = vmatpush.msra.mxu0 %v84
    %106 = vmatpush.msra.mxu0 %v83
    %107 = vmatpush.msra.mxu0 %v82
    %108 = vmatpush.msra.mxu0 %v81
    %109 = vmatpush.msra.mxu0 %v80
    %110 = vmatpush.msra.mxu0 %v79
    %111 = vmatmul.f32.gmra.mxu0 %v47
    %v112 = vpop.f32.mrf.mxu0
    %v113 = vadd.f32 0.0, %v112
    %114 = vmatmul.f32.gmra.mxu0 %v48
    %v115 = vpop.f32.mrf.mxu0
    %v116 = vadd.f32 0.0, %v115
    %117 = vmatmul.f32.gmra.mxu0 %v49
    %v118 = vpop.f32.mrf.mxu0
    %v119 = vadd.f32 0.0, %v118
    %120 = vmatmul.f32.gmra.mxu0 %v50
    %v121 = vpop.f32.mrf.mxu0
    %v122 = vadd.f32 0.0, %v121
    %123 = vmatmul.f32.gmra.mxu0 %v51
    %v124 = vpop.f32.mrf.mxu0
    %v125 = vadd.f32 0.0, %v124
    %126 = vmatmul.f32.gmra.mxu0 %v52
    %v127 = vpop.f32.mrf.mxu0
    %v128 = vadd.f32 0.0, %v127
    %129 = vmatmul.f32.gmra.mxu0 %v53
    %v130 = vpop.f32.mrf.mxu0
    %v131 = vadd.f32 0.0, %v130
    %132 = vmatmul.f32.gmra.mxu0 %v54
    %v133 = vpop.f32.mrf.mxu0
    %v134 = vadd.f32 0.0, %v133
    %135 = vmatmul.f32.gmra.mxu0 %v55
    %v136 = vpop.f32.mrf.mxu0
    %v137 = vadd.f32 0.0, %v136
    %138 = vmatmul.f32.gmra.mxu0 %v56
    %v139 = vpop.f32.mrf.mxu0
    %v140 = vadd.f32 0.0, %v139
    %141 = vmatmul.f32.gmra.mxu0 %v57
    %v142 = vpop.f32.mrf.mxu0
    %v143 = vadd.f32 0.0, %v142
    %144 = vmatmul.f32.gmra.mxu0 %v58
    %v145 = vpop.f32.mrf.mxu0
    %v146 = vadd.f32 0.0, %v145
    %147 = vmatmul.f32.gmra.mxu0 %v59
    %v148 = vpop.f32.mrf.mxu0
    %v149 = vadd.f32 0.0, %v148
    %150 = vmatmul.f32.gmra.mxu0 %v60
    %v151 = vpop.f32.mrf.mxu0
    %v152 = vadd.f32 0.0, %v151
    %153 = vmatmul.f32.gmra.mxu0 %v61
    %v154 = vpop.f32.mrf.mxu0
    %v155 = vadd.f32 0.0, %v154
    %156 = vmatmul.f32.gmra.mxu0 %v62
    %v157 = vpop.f32.mrf.mxu0
    %v158 = vadd.f32 0.0, %v157
    %159 = vmatmul.f32.gmra.mxu0 %v63
    %v160 = vpop.f32.mrf.mxu0
    %v161 = vadd.f32 0.0, %v160
    %162 = vmatmul.f32.gmra.mxu0 %v64
    %v163 = vpop.f32.mrf.mxu0
    %v164 = vadd.f32 0.0, %v163
    %165 = vmatmul.f32.gmra.mxu0 %v65
    %v166 = vpop.f32.mrf.mxu0
    %v167 = vadd.f32 0.0, %v166
    %168 = vmatmul.f32.gmra.mxu0 %v66
    %v169 = vpop.f32.mrf.mxu0
    %v170 = vadd.f32 0.0, %v169
    %171 = vmatmul.f32.gmra.mxu0 %v67
    %v172 = vpop.f32.mrf.mxu0
    %v173 = vadd.f32 0.0, %v172
    %174 = vmatmul.f32.gmra.mxu0 %v68
    %v175 = vpop.f32.mrf.mxu0
    %v176 = vadd.f32 0.0, %v175
    %177 = vmatmul.f32.gmra.mxu0 %v69
    %v178 = vpop.f32.mrf.mxu0
    %v179 = vadd.f32 0.0, %v178
    %180 = vmatmul.f32.gmra.mxu0 %v70
    %v181 = vpop.f32.mrf.mxu0
    %v182 = vadd.f32 0.0, %v181
    %183 = vmatmul.f32.gmra.mxu0 %v71
    %v184 = vpop.f32.mrf.mxu0
    %v185 = vadd.f32 0.0, %v184
    %186 = vmatmul.f32.gmra.mxu0 %v72
    %v187 = vpop.f32.mrf.mxu0
    %v188 = vadd.f32 0.0, %v187
    %189 = vmatmul.f32.gmra.mxu0 %v73
    %v190 = vpop.f32.mrf.mxu0
    %v191 = vadd.f32 0.0, %v190
    %192 = vmatmul.f32.gmra.mxu0 %v74
    %v193 = vpop.f32.mrf.mxu0
    %v194 = vadd.f32 0.0, %v193
    %195 = vmatmul.f32.gmra.mxu0 %v75
    %v196 = vpop.f32.mrf.mxu0
    %v197 = vadd.f32 0.0, %v196
    %198 = vmatmul.f32.gmra.mxu0 %v76
    %v199 = vpop.f32.mrf.mxu0
    %v200 = vadd.f32 0.0, %v199
    %201 = vmatmul.f32.gmra.mxu0 %v77
    %v202 = vpop.f32.mrf.mxu0
    %v203 = vadd.f32 0.0, %v202
    %204 = vmatmul.f32.gmra.mxu0 %v78
    %v205 = vpop.f32.mrf.mxu0
    %v206 = vadd.f32 0.0, %v205
    %207 = vdwg.mxu0
    %208 = vmatpush.xpose.msra.mxu0 %v158
    %209 = vmatpush.xpose.msra.mxu0 %v155
    %210 = vmatpush.xpose.msra.mxu0 %v152
    %211 = vmatpush.xpose.msra.mxu0 %v149
    %212 = vmatpush.xpose.msra.mxu0 %v146
    %213 = vmatpush.xpose.msra.mxu0 %v143
    %214 = vmatpush.xpose.msra.mxu0 %v140
    %215 = vmatpush.xpose.msra.mxu0 %v137
    %216 = vmatpush.xpose.msra.mxu0 %v134
    %217 = vmatpush.xpose.msra.mxu0 %v131
    %218 = vmatpush.xpose.msra.mxu0 %v128
    %219 = vmatpush.xpose.msra.mxu0 %v125
    %220 = vmatpush.xpose.msra.mxu0 %v122
    %221 = vmatpush.xpose.msra.mxu0 %v119
    %222 = vmatpush.xpose.msra.mxu0 %v116
    %223 = vmatpush.xpose.msra.mxu0 %v113
    %224 = vmatmul.f32.gmra.mxu0 %v47
    %v225 = vpop.f32.mrf.mxu0
    %v226 = vadd.f32 0.0, %v225
    %227 = vmatmul.f32.gmra.mxu0 %v48
    %v228 = vpop.f32.mrf.mxu0
    %v229 = vadd.f32 0.0, %v228
    %230 = vmatmul.f32.gmra.mxu0 %v49
    %v231 = vpop.f32.mrf.mxu0
    %v232 = vadd.f32 0.0, %v231
    %233 = vmatmul.f32.gmra.mxu0 %v50
    %v234 = vpop.f32.mrf.mxu0
    %v235 = vadd.f32 0.0, %v234
    %236 = vmatmul.f32.gmra.mxu0 %v51
    %v237 = vpop.f32.mrf.mxu0
    %v238 = vadd.f32 0.0, %v237
    %239 = vmatmul.f32.gmra.mxu0 %v52
    %v240 = vpop.f32.mrf.mxu0
    %v241 = vadd.f32 0.0, %v240
    %242 = vmatmul.f32.gmra.mxu0 %v53
    %v243 = vpop.f32.mrf.mxu0
    %v244 = vadd.f32 0.0, %v243
    %245 = vmatmul.f32.gmra.mxu0 %v54
    %v246 = vpop.f32.mrf.mxu0
    %v247 = vadd.f32 0.0, %v246
    %248 = vmatmul.f32.gmra.mxu0 %v55
    %v249 = vpop.f32.mrf.mxu0
    %v250 = vadd.f32 0.0, %v249
    %251 = vmatmul.f32.gmra.mxu0 %v56
    %v252 = vpop.f32.mrf.mxu0
    %v253 = vadd.f32 0.0, %v252
    %254 = vmatmul.f32.gmra.mxu0 %v57
    %v255 = vpop.f32.mrf.mxu0
    %v256 = vadd.f32 0.0, %v255
    %257 = vmatmul.f32.gmra.mxu0 %v58
    %v258 = vpop.f32.mrf.mxu0
    %v259 = vadd.f32 0.0, %v258
    %260 = vmatmul.f32.gmra.mxu0 %v59
    %v261 = vpop.f32.mrf.mxu0
    %v262 = vadd.f32 0.0, %v261
    %263 = vmatmul.f32.gmra.mxu0 %v60
    %v264 = vpop.f32.mrf.mxu0
    %v265 = vadd.f32 0.0, %v264
    %266 = vmatmul.f32.gmra.mxu0 %v61
    %v267 = vpop.f32.mrf.mxu0
    %v268 = vadd.f32 0.0, %v267
    %269 = vmatmul.f32.gmra.mxu0 %v62
    %v270 = vpop.f32.mrf.mxu0
    %v271 = vadd.f32 0.0, %v270
    %272 = vdwg.mxu0
    %273 = vmatpush.xpose.msra.mxu0 %v206
    %274 = vmatpush.xpose.msra.mxu0 %v203
    %275 = vmatpush.xpose.msra.mxu0 %v200
    %276 = vmatpush.xpose.msra.mxu0 %v197
    %277 = vmatpush.xpose.msra.mxu0 %v194
    %278 = vmatpush.xpose.msra.mxu0 %v191
    %279 = vmatpush.xpose.msra.mxu0 %v188
    %280 = vmatpush.xpose.msra.mxu0 %v185
    %281 = vmatpush.xpose.msra.mxu0 %v182
    %282 = vmatpush.xpose.msra.mxu0 %v179
    %283 = vmatpush.xpose.msra.mxu0 %v176
    %284 = vmatpush.xpose.msra.mxu0 %v173
    %285 = vmatpush.xpose.msra.mxu0 %v170
    %286 = vmatpush.xpose.msra.mxu0 %v167
    %287 = vmatpush.xpose.msra.mxu0 %v164
    %288 = vmatpush.xpose.msra.mxu0 %v161
    %289 = vmatmul.f32.gmra.mxu0 %v63
    %v290 = vpop.f32.mrf.mxu0
    %v291 = vadd.f32 0.0, %v290
    %292 = vmatmul.f32.gmra.mxu0 %v64
    %v293 = vpop.f32.mrf.mxu0
    %v294 = vadd.f32 0.0, %v293
    %295 = vmatmul.f32.gmra.mxu0 %v65
    %v296 = vpop.f32.mrf.mxu0
    %v297 = vadd.f32 0.0, %v296
    %298 = vmatmul.f32.gmra.mxu0 %v66
    %v299 = vpop.f32.mrf.mxu0
    %v300 = vadd.f32 0.0, %v299
    %301 = vmatmul.f32.gmra.mxu0 %v67
    %v302 = vpop.f32.mrf.mxu0
    %v303 = vadd.f32 0.0, %v302
    %304 = vmatmul.f32.gmra.mxu0 %v68
    %v305 = vpop.f32.mrf.mxu0
    %v306 = vadd.f32 0.0, %v305
    %307 = vmatmul.f32.gmra.mxu0 %v69
    %v308 = vpop.f32.mrf.mxu0
    %v309 = vadd.f32 0.0, %v308
    %310 = vmatmul.f32.gmra.mxu0 %v70
    %v311 = vpop.f32.mrf.mxu0
    %v312 = vadd.f32 0.0, %v311
    %313 = vmatmul.f32.gmra.mxu0 %v71
    %v314 = vpop.f32.mrf.mxu0
    %v315 = vadd.f32 0.0, %v314
    %316 = vmatmul.f32.gmra.mxu0 %v72
    %v317 = vpop.f32.mrf.mxu0
    %v318 = vadd.f32 0.0, %v317
    %319 = vmatmul.f32.gmra.mxu0 %v73
    %v320 = vpop.f32.mrf.mxu0
    %v321 = vadd.f32 0.0, %v320
    %322 = vmatmul.f32.gmra.mxu0 %v74
    %v323 = vpop.f32.mrf.mxu0
    %v324 = vadd.f32 0.0, %v323
    %325 = vmatmul.f32.gmra.mxu0 %v75
    %v326 = vpop.f32.mrf.mxu0
    %v327 = vadd.f32 0.0, %v326
    %328 = vmatmul.f32.gmra.mxu0 %v76
    %v329 = vpop.f32.mrf.mxu0
    %v330 = vadd.f32 0.0, %v329
    %331 = vmatmul.f32.gmra.mxu0 %v77
    %v332 = vpop.f32.mrf.mxu0
    %v333 = vadd.f32 0.0, %v332
    %334 = vmatmul.f32.gmra.mxu0 %v78
    %v335 = vpop.f32.mrf.mxu0
    %v336 = vadd.f32 0.0, %v335
    %337 = vdwg.mxu0
    %v338 = vld [vmem:[%s0] sm:$0x1]
    %v339 = vld [vmem:[%s0 + $0x1] sm:$0x1]
    %v340 = vlaneseq
    %v341 = vshrl.u32 %v340, 7
    %v342 = vadd.s32 %v341, 8
    %v343 = vadd.s32 %v341, 16
    %v344 = vadd.s32 %v341, 24
    %v345 = vadd.s32 %v341, 32
    %v346 = vadd.s32 %v341, 40
    %v347 = vadd.s32 %v341, 48
    %v348 = vadd.s32 %v341, 56
    %v349 = vadd.s32 %v341, 64
    %v350 = vadd.s32 %v341, 72
    %v351 = vadd.s32 %v341, 80
    %v352 = vadd.s32 %v341, 88
    %v353 = vadd.s32 %v341, 96
    %v354 = vadd.s32 %v341, 104
    %v355 = vadd.s32 %v341, 112
    %v356 = vadd.s32 %v341, 120
    %v357 = vlaneseq
    %v358 = vand.u32 %v357, 127
    %v359 = vsub.s32 %v341, 2
    %v360 = vsub.s32 %v342, 2
    %v361 = vsub.s32 %v343, 2
    %v362 = vsub.s32 %v344, 2
    %v363 = vsub.s32 %v345, 2
    %v364 = vsub.s32 %v346, 2
    %v365 = vsub.s32 %v347, 2
    %v366 = vsub.s32 %v348, 2
    %v367 = vsub.s32 %v349, 2
    %v368 = vsub.s32 %v350, 2
    %v369 = vsub.s32 %v351, 2
    %v370 = vsub.s32 %v352, 2
    %v371 = vsub.s32 %v353, 2
    %v372 = vsub.s32 %v354, 2
    %v373 = vsub.s32 %v355, 2
    %v374 = vsub.s32 %v356, 2
    %vm375 = vcmp.gt.s32.totalorder %v359, 0
    %v376 = vsel %vm375, %v359, 0
    %vm377 = vcmp.gt.s32.totalorder %v360, 0
    %v378 = vsel %vm377, %v360, 0
    %vm379 = vcmp.gt.s32.totalorder %v361, 0
    %v380 = vsel %vm379, %v361, 0
    %vm381 = vcmp.gt.s32.totalorder %v362, 0
    %v382 = vsel %vm381, %v362, 0
    %vm383 = vcmp.gt.s32.totalorder %v363, 0
    %v384 = vsel %vm383, %v363, 0
    %vm385 = vcmp.gt.s32.totalorder %v364, 0
    %v386 = vsel %vm385, %v364, 0
    %vm387 = vcmp.gt.s32.totalorder %v365, 0
    %v388 = vsel %vm387, %v365, 0
    %vm389 = vcmp.gt.s32.totalorder %v366, 0
    %v390 = vsel %vm389, %v366, 0
    %vm391 = vcmp.gt.s32.totalorder %v367, 0
    %v392 = vsel %vm391, %v367, 0
    %vm393 = vcmp.gt.s32.totalorder %v368, 0
    %v394 = vsel %vm393, %v368, 0
    %vm395 = vcmp.gt.s32.totalorder %v369, 0
    %v396 = vsel %vm395, %v369, 0
    %vm397 = vcmp.gt.s32.totalorder %v370, 0
    %v398 = vsel %vm397, %v370, 0
    %vm399 = vcmp.gt.s32.totalorder %v371, 0
    %v400 = vsel %vm399, %v371, 0
    %vm401 = vcmp.gt.s32.totalorder %v372, 0
    %v402 = vsel %vm401, %v372, 0
    %vm403 = vcmp.gt.s32.totalorder %v373, 0
    %v404 = vsel %vm403, %v373, 0
    %vm405 = vcmp.gt.s32.totalorder %v374, 0
    %v406 = vsel %vm405, %v374, 0
    %v407 = vadd.s32 %v341, 2
    %v408 = vadd.s32 %v342, 2
    %v409 = vadd.s32 %v343, 2
    %v410 = vadd.s32 %v344, 2
    %v411 = vadd.s32 %v345, 2
    %v412 = vadd.s32 %v346, 2
    %v413 = vadd.s32 %v347, 2
    %v414 = vadd.s32 %v348, 2
    %v415 = vadd.s32 %v349, 2
    %v416 = vadd.s32 %v350, 2
    %v417 = vadd.s32 %v351, 2
    %v418 = vadd.s32 %v352, 2
    %v419 = vadd.s32 %v353, 2
    %v420 = vadd.s32 %v354, 2
    %v421 = vadd.s32 %v355, 2
    %v422 = vadd.s32 %v356, 2
    %v423 = vsub.s32 %v338, 1
    %v424 = vsub.s32 %v339, 1
    %v425 = vperm.slane %v423, 0
    %v426 = vperm.slane %v424, 0
    %427 = vset.pattern.permute.xlu0 0
    %428 = vperm.xlu0 %427, %v425
    %v429 = vpop.permute.xlu0 %428
    %430 = vset.pattern.permute.xlu0 0
    %431 = vperm.xlu0 %430, %v426
    %v432 = vpop.permute.xlu0 %431
    %vm433 = vcmp.lt.s32.totalorder %v407, %v429
    %v434 = vsel %vm433, %v407, %v429
    %vm435 = vcmp.lt.s32.totalorder %v408, %v429
    %v436 = vsel %vm435, %v408, %v429
    %vm437 = vcmp.lt.s32.totalorder %v409, %v429
    %v438 = vsel %vm437, %v409, %v429
    %vm439 = vcmp.lt.s32.totalorder %v410, %v429
    %v440 = vsel %vm439, %v410, %v429
    %vm441 = vcmp.lt.s32.totalorder %v411, %v429
    %v442 = vsel %vm441, %v411, %v429
    %vm443 = vcmp.lt.s32.totalorder %v412, %v429
    %v444 = vsel %vm443, %v412, %v429
    %vm445 = vcmp.lt.s32.totalorder %v413, %v429
    %v446 = vsel %vm445, %v413, %v429
    %vm447 = vcmp.lt.s32.totalorder %v414, %v429
    %v448 = vsel %vm447, %v414, %v429
    %vm449 = vcmp.lt.s32.totalorder %v415, %v429
    %v450 = vsel %vm449, %v415, %v429
    %vm451 = vcmp.lt.s32.totalorder %v416, %v429
    %v452 = vsel %vm451, %v416, %v429
    %vm453 = vcmp.lt.s32.totalorder %v417, %v429
    %v454 = vsel %vm453, %v417, %v429
    %vm455 = vcmp.lt.s32.totalorder %v418, %v429
    %v456 = vsel %vm455, %v418, %v429
    %vm457 = vcmp.lt.s32.totalorder %v419, %v429
    %v458 = vsel %vm457, %v419, %v429
    %vm459 = vcmp.lt.s32.totalorder %v420, %v429
    %v460 = vsel %vm459, %v420, %v429
    %vm461 = vcmp.lt.s32.totalorder %v421, %v429
    %v462 = vsel %vm461, %v421, %v429
    %vm463 = vcmp.lt.s32.totalorder %v422, %v429
    %v464 = vsel %vm463, %v422, %v429
    %vm465 = vcmp.lt.s32.totalorder %v407, %v432
    %v466 = vsel %vm465, %v407, %v432
    %vm467 = vcmp.lt.s32.totalorder %v408, %v432
    %v468 = vsel %vm467, %v408, %v432
    %vm469 = vcmp.lt.s32.totalorder %v409, %v432
    %v470 = vsel %vm469, %v409, %v432
    %vm471 = vcmp.lt.s32.totalorder %v410, %v432
    %v472 = vsel %vm471, %v410, %v432
    %vm473 = vcmp.lt.s32.totalorder %v411, %v432
    %v474 = vsel %vm473, %v411, %v432
    %vm475 = vcmp.lt.s32.totalorder %v412, %v432
    %v476 = vsel %vm475, %v412, %v432
    %vm477 = vcmp.lt.s32.totalorder %v413, %v432
    %v478 = vsel %vm477, %v413, %v432
    %vm479 = vcmp.lt.s32.totalorder %v414, %v432
    %v480 = vsel %vm479, %v414, %v432
    %vm481 = vcmp.lt.s32.totalorder %v415, %v432
    %v482 = vsel %vm481, %v415, %v432
    %vm483 = vcmp.lt.s32.totalorder %v416, %v432
    %v484 = vsel %vm483, %v416, %v432
    %vm485 = vcmp.lt.s32.totalorder %v417, %v432
    %v486 = vsel %vm485, %v417, %v432
    %vm487 = vcmp.lt.s32.totalorder %v418, %v432
    %v488 = vsel %vm487, %v418, %v432
    %vm489 = vcmp.lt.s32.totalorder %v419, %v432
    %v490 = vsel %vm489, %v419, %v432
    %vm491 = vcmp.lt.s32.totalorder %v420, %v432
    %v492 = vsel %vm491, %v420, %v432
    %vm493 = vcmp.lt.s32.totalorder %v421, %v432
    %v494 = vsel %vm493, %v421, %v432
    %vm495 = vcmp.lt.s32.totalorder %v422, %v432
    %v496 = vsel %vm495, %v422, %v432
    %vm497 = vcmp.ge.s32.totalorder %v358, %v376
    %vm498 = vcmp.ge.s32.totalorder %v358, %v378
    %vm499 = vcmp.ge.s32.totalorder %v358, %v380
    %vm500 = vcmp.ge.s32.totalorder %v358, %v382
    %vm501 = vcmp.ge.s32.totalorder %v358, %v384
    %vm502 = vcmp.ge.s32.totalorder %v358, %v386
    %vm503 = vcmp.ge.s32.totalorder %v358, %v388
    %vm504 = vcmp.ge.s32.totalorder %v358, %v390
    %vm505 = vcmp.ge.s32.totalorder %v358, %v392
    %vm506 = vcmp.ge.s32.totalorder %v358, %v394
    %vm507 = vcmp.ge.s32.totalorder %v358, %v396
    %vm508 = vcmp.ge.s32.totalorder %v358, %v398
    %vm509 = vcmp.ge.s32.totalorder %v358, %v400
    %vm510 = vcmp.ge.s32.totalorder %v358, %v402
    %vm511 = vcmp.ge.s32.totalorder %v358, %v404
    %vm512 = vcmp.ge.s32.totalorder %v358, %v406
    %vm513 = vcmp.le.s32.totalorder %v358, %v434
    %vm514 = vcmp.le.s32.totalorder %v358, %v436
    %vm515 = vcmp.le.s32.totalorder %v358, %v438
    %vm516 = vcmp.le.s32.totalorder %v358, %v440
    %vm517 = vcmp.le.s32.totalorder %v358, %v442
    %vm518 = vcmp.le.s32.totalorder %v358, %v444
    %vm519 = vcmp.le.s32.totalorder %v358, %v446
    %vm520 = vcmp.le.s32.totalorder %v358, %v448
    %vm521 = vcmp.le.s32.totalorder %v358, %v450
    %vm522 = vcmp.le.s32.totalorder %v358, %v452
    %vm523 = vcmp.le.s32.totalorder %v358, %v454
    %vm524 = vcmp.le.s32.totalorder %v358, %v456
    %vm525 = vcmp.le.s32.totalorder %v358, %v458
    %vm526 = vcmp.le.s32.totalorder %v358, %v460
    %vm527 = vcmp.le.s32.totalorder %v358, %v462
    %vm528 = vcmp.le.s32.totalorder %v358, %v464
    %vm529 = vcmp.le.s32.totalorder %v358, %v466
    %vm530 = vcmp.le.s32.totalorder %v358, %v468
    %vm531 = vcmp.le.s32.totalorder %v358, %v470
    %vm532 = vcmp.le.s32.totalorder %v358, %v472
    %vm533 = vcmp.le.s32.totalorder %v358, %v474
    %vm534 = vcmp.le.s32.totalorder %v358, %v476
    %vm535 = vcmp.le.s32.totalorder %v358, %v478
    %vm536 = vcmp.le.s32.totalorder %v358, %v480
    %vm537 = vcmp.le.s32.totalorder %v358, %v482
    %vm538 = vcmp.le.s32.totalorder %v358, %v484
    %vm539 = vcmp.le.s32.totalorder %v358, %v486
    %vm540 = vcmp.le.s32.totalorder %v358, %v488
    %vm541 = vcmp.le.s32.totalorder %v358, %v490
    %vm542 = vcmp.le.s32.totalorder %v358, %v492
    %vm543 = vcmp.le.s32.totalorder %v358, %v494
    %vm544 = vcmp.le.s32.totalorder %v358, %v496
    %vm545 = vmand %vm497, %vm513
    %vm546 = vmand %vm498, %vm514
    %vm547 = vmand %vm499, %vm515
    %vm548 = vmand %vm500, %vm516
    %vm549 = vmand %vm501, %vm517
    %vm550 = vmand %vm502, %vm518
    %vm551 = vmand %vm503, %vm519
    %vm552 = vmand %vm504, %vm520
    %vm553 = vmand %vm505, %vm521
    %vm554 = vmand %vm506, %vm522
    %vm555 = vmand %vm507, %vm523
    %vm556 = vmand %vm508, %vm524
    %vm557 = vmand %vm509, %vm525
    %vm558 = vmand %vm510, %vm526
    %vm559 = vmand %vm511, %vm527
    %vm560 = vmand %vm512, %vm528
    %vm561 = vmand %vm497, %vm529
    %vm562 = vmand %vm498, %vm530
    %vm563 = vmand %vm499, %vm531
    %vm564 = vmand %vm500, %vm532
    %vm565 = vmand %vm501, %vm533
    %vm566 = vmand %vm502, %vm534
    %vm567 = vmand %vm503, %vm535
    %vm568 = vmand %vm504, %vm536
    %vm569 = vmand %vm505, %vm537
    %vm570 = vmand %vm506, %vm538
    %vm571 = vmand %vm507, %vm539
    %vm572 = vmand %vm508, %vm540
    %vm573 = vmand %vm509, %vm541
    %vm574 = vmand %vm510, %vm542
    %vm575 = vmand %vm511, %vm543
    %vm576 = vmand %vm512, %vm544
    %v577 = vperm.slane %v338, 0
    %v578 = vperm.slane %v339, 0
    %579 = vset.pattern.permute.xlu0 0
    %580 = vperm.xlu0 %579, %v577
    %v581 = vpop.permute.xlu0 %580
    %582 = vset.pattern.permute.xlu0 0
    %583 = vperm.xlu0 %582, %v578
    %v584 = vpop.permute.xlu0 %583
    %vm585 = vcmp.lt.s32.totalorder %v341, %v581
    %vm586 = vcmp.lt.s32.totalorder %v342, %v581
    %vm587 = vcmp.lt.s32.totalorder %v343, %v581
    %vm588 = vcmp.lt.s32.totalorder %v344, %v581
    %vm589 = vcmp.lt.s32.totalorder %v345, %v581
    %vm590 = vcmp.lt.s32.totalorder %v346, %v581
    %vm591 = vcmp.lt.s32.totalorder %v347, %v581
    %vm592 = vcmp.lt.s32.totalorder %v348, %v581
    %vm593 = vcmp.lt.s32.totalorder %v349, %v581
    %vm594 = vcmp.lt.s32.totalorder %v350, %v581
    %vm595 = vcmp.lt.s32.totalorder %v351, %v581
    %vm596 = vcmp.lt.s32.totalorder %v352, %v581
    %vm597 = vcmp.lt.s32.totalorder %v353, %v581
    %vm598 = vcmp.lt.s32.totalorder %v354, %v581
    %vm599 = vcmp.lt.s32.totalorder %v355, %v581
    %vm600 = vcmp.lt.s32.totalorder %v356, %v581
    %vm601 = vcmp.lt.s32.totalorder %v341, %v584
    %vm602 = vcmp.lt.s32.totalorder %v342, %v584
    %vm603 = vcmp.lt.s32.totalorder %v343, %v584
    %vm604 = vcmp.lt.s32.totalorder %v344, %v584
    %vm605 = vcmp.lt.s32.totalorder %v345, %v584
    %vm606 = vcmp.lt.s32.totalorder %v346, %v584
    %vm607 = vcmp.lt.s32.totalorder %v347, %v584
    %vm608 = vcmp.lt.s32.totalorder %v348, %v584
    %vm609 = vcmp.lt.s32.totalorder %v349, %v584
    %vm610 = vcmp.lt.s32.totalorder %v350, %v584
    %vm611 = vcmp.lt.s32.totalorder %v351, %v584
    %vm612 = vcmp.lt.s32.totalorder %v352, %v584
    %vm613 = vcmp.lt.s32.totalorder %v353, %v584
    %vm614 = vcmp.lt.s32.totalorder %v354, %v584
    %vm615 = vcmp.lt.s32.totalorder %v355, %v584
    %vm616 = vcmp.lt.s32.totalorder %v356, %v584
    %vm617 = vmand %vm545, %vm585
    %vm618 = vmand %vm546, %vm586
    %vm619 = vmand %vm547, %vm587
    %vm620 = vmand %vm548, %vm588
    %vm621 = vmand %vm549, %vm589
    %vm622 = vmand %vm550, %vm590
    %vm623 = vmand %vm551, %vm591
    %vm624 = vmand %vm552, %vm592
    %vm625 = vmand %vm553, %vm593
    %vm626 = vmand %vm554, %vm594
    %vm627 = vmand %vm555, %vm595
    %vm628 = vmand %vm556, %vm596
    %vm629 = vmand %vm557, %vm597
    %vm630 = vmand %vm558, %vm598
    %vm631 = vmand %vm559, %vm599
    %vm632 = vmand %vm560, %vm600
    %vm633 = vmand %vm561, %vm601
    %vm634 = vmand %vm562, %vm602
    %vm635 = vmand %vm563, %vm603
    %vm636 = vmand %vm564, %vm604
    %vm637 = vmand %vm565, %vm605
    %vm638 = vmand %vm566, %vm606
    %vm639 = vmand %vm567, %vm607
    %vm640 = vmand %vm568, %vm608
    %vm641 = vmand %vm569, %vm609
    %vm642 = vmand %vm570, %vm610
    %vm643 = vmand %vm571, %vm611
    %vm644 = vmand %vm572, %vm612
    %vm645 = vmand %vm573, %vm613
    %vm646 = vmand %vm574, %vm614
    %vm647 = vmand %vm575, %vm615
    %vm648 = vmand %vm576, %vm616
    %v649 = vsel %vm617, %v226, -1e+30
    %v650 = vsel %vm618, %v229, -1e+30
    %v651 = vsel %vm619, %v232, -1e+30
    %v652 = vsel %vm620, %v235, -1e+30
    %v653 = vsel %vm621, %v238, -1e+30
    %v654 = vsel %vm622, %v241, -1e+30
    %v655 = vsel %vm623, %v244, -1e+30
    %v656 = vsel %vm624, %v247, -1e+30
    %v657 = vsel %vm625, %v250, -1e+30
    %v658 = vsel %vm626, %v253, -1e+30
    %v659 = vsel %vm627, %v256, -1e+30
    %v660 = vsel %vm628, %v259, -1e+30
    %v661 = vsel %vm629, %v262, -1e+30
    %v662 = vsel %vm630, %v265, -1e+30
    %v663 = vsel %vm631, %v268, -1e+30
    %v664 = vsel %vm632, %v271, -1e+30
    %v665 = vsel %vm633, %v291, -1e+30
    %v666 = vsel %vm634, %v294, -1e+30
    %v667 = vsel %vm635, %v297, -1e+30
    %v668 = vsel %vm636, %v300, -1e+30
    %v669 = vsel %vm637, %v303, -1e+30
    %v670 = vsel %vm638, %v306, -1e+30
    %v671 = vsel %vm639, %v309, -1e+30
    %v672 = vsel %vm640, %v312, -1e+30
    %v673 = vsel %vm641, %v315, -1e+30
    %v674 = vsel %vm642, %v318, -1e+30
    %v675 = vsel %vm643, %v321, -1e+30
    %v676 = vsel %vm644, %v324, -1e+30
    %v677 = vsel %vm645, %v327, -1e+30
    %v678 = vsel %vm646, %v330, -1e+30
    %v679 = vsel %vm647, %v333, -1e+30
    %v680 = vsel %vm648, %v336, -1e+30
    %681 = vmax.xlane.f32.xlu0 %v649
    %v682 = vpop.xlane.xlu0 %681
    %683 = vmax.xlane.f32.xlu0 %v650
    %v684 = vpop.xlane.xlu0 %683
    %685 = vmax.xlane.f32.xlu0 %v651
    %v686 = vpop.xlane.xlu0 %685
    %687 = vmax.xlane.f32.xlu0 %v652
    %v688 = vpop.xlane.xlu0 %687
    %689 = vmax.xlane.f32.xlu0 %v653
    %v690 = vpop.xlane.xlu0 %689
    %691 = vmax.xlane.f32.xlu0 %v654
    %v692 = vpop.xlane.xlu0 %691
    %693 = vmax.xlane.f32.xlu0 %v655
    %v694 = vpop.xlane.xlu0 %693
    %695 = vmax.xlane.f32.xlu0 %v656
    %v696 = vpop.xlane.xlu0 %695
    %697 = vmax.xlane.f32.xlu0 %v657
    %v698 = vpop.xlane.xlu0 %697
    %699 = vmax.xlane.f32.xlu0 %v658
    %v700 = vpop.xlane.xlu0 %699
    %701 = vmax.xlane.f32.xlu0 %v659
    %v702 = vpop.xlane.xlu0 %701
    %703 = vmax.xlane.f32.xlu0 %v660
    %v704 = vpop.xlane.xlu0 %703
    %705 = vmax.xlane.f32.xlu0 %v661
    %v706 = vpop.xlane.xlu0 %705
    %707 = vmax.xlane.f32.xlu0 %v662
    %v708 = vpop.xlane.xlu0 %707
    %709 = vmax.xlane.f32.xlu0 %v663
    %v710 = vpop.xlane.xlu0 %709
    %711 = vmax.xlane.f32.xlu0 %v664
    %v712 = vpop.xlane.xlu0 %711
    %713 = vmax.xlane.f32.xlu0 %v665
    %v714 = vpop.xlane.xlu0 %713
    %715 = vmax.xlane.f32.xlu0 %v666
    %v716 = vpop.xlane.xlu0 %715
    %717 = vmax.xlane.f32.xlu0 %v667
    %v718 = vpop.xlane.xlu0 %717
    %719 = vmax.xlane.f32.xlu0 %v668
    %v720 = vpop.xlane.xlu0 %719
    %721 = vmax.xlane.f32.xlu0 %v669
    %v722 = vpop.xlane.xlu0 %721
    %723 = vmax.xlane.f32.xlu0 %v670
    %v724 = vpop.xlane.xlu0 %723
    %725 = vmax.xlane.f32.xlu0 %v671
    %v726 = vpop.xlane.xlu0 %725
    %727 = vmax.xlane.f32.xlu0 %v672
    %v728 = vpop.xlane.xlu0 %727
    %729 = vmax.xlane.f32.xlu0 %v673
    %v730 = vpop.xlane.xlu0 %729
    %731 = vmax.xlane.f32.xlu0 %v674
    %v732 = vpop.xlane.xlu0 %731
    %733 = vmax.xlane.f32.xlu0 %v675
    %v734 = vpop.xlane.xlu0 %733
    %735 = vmax.xlane.f32.xlu0 %v676
    %v736 = vpop.xlane.xlu0 %735
    %737 = vmax.xlane.f32.xlu0 %v677
    %v738 = vpop.xlane.xlu0 %737
    %739 = vmax.xlane.f32.xlu0 %v678
    %v740 = vpop.xlane.xlu0 %739
    %741 = vmax.xlane.f32.xlu0 %v679
    %v742 = vpop.xlane.xlu0 %741
    %743 = vmax.xlane.f32.xlu0 %v680
    %v744 = vpop.xlane.xlu0 %743
    %v745 = vsub.f32 %v649, %v682
    %v746 = vsub.f32 %v650, %v684
    %v747 = vsub.f32 %v651, %v686
    %v748 = vsub.f32 %v652, %v688
    %v749 = vsub.f32 %v653, %v690
    %v750 = vsub.f32 %v654, %v692
    %v751 = vsub.f32 %v655, %v694
    %v752 = vsub.f32 %v656, %v696
    %v753 = vsub.f32 %v657, %v698
    %v754 = vsub.f32 %v658, %v700
    %v755 = vsub.f32 %v659, %v702
    %v756 = vsub.f32 %v660, %v704
    %v757 = vsub.f32 %v661, %v706
    %v758 = vsub.f32 %v662, %v708
    %v759 = vsub.f32 %v663, %v710
    %v760 = vsub.f32 %v664, %v712
    %v761 = vsub.f32 %v665, %v714
    %v762 = vsub.f32 %v666, %v716
    %v763 = vsub.f32 %v667, %v718
    %v764 = vsub.f32 %v668, %v720
    %v765 = vsub.f32 %v669, %v722
    %v766 = vsub.f32 %v670, %v724
    %v767 = vsub.f32 %v671, %v726
    %v768 = vsub.f32 %v672, %v728
    %v769 = vsub.f32 %v673, %v730
    %v770 = vsub.f32 %v674, %v732
    %v771 = vsub.f32 %v675, %v734
    %v772 = vsub.f32 %v676, %v736
    %v773 = vsub.f32 %v677, %v738
    %v774 = vsub.f32 %v678, %v740
    %v775 = vsub.f32 %v679, %v742
    %v776 = vsub.f32 %v680, %v744
    %v777 = vmul.f32 %v745, 1.442695
    %v778 = vpow.pop %v777
    %v779 = vmul.f32 %v746, 1.442695
    %v780 = vpow.pop %v779
    %v781 = vmul.f32 %v747, 1.442695
    %v782 = vpow.pop %v781
    %v783 = vmul.f32 %v748, 1.442695
    %v784 = vpow.pop %v783
    %v785 = vmul.f32 %v749, 1.442695
    %v786 = vpow.pop %v785
    %v787 = vmul.f32 %v750, 1.442695
    %v788 = vpow.pop %v787
    %v789 = vmul.f32 %v751, 1.442695
    %v790 = vpow.pop %v789
    %v791 = vmul.f32 %v752, 1.442695
    %v792 = vpow.pop %v791
    %v793 = vmul.f32 %v753, 1.442695
    %v794 = vpow.pop %v793
    %v795 = vmul.f32 %v754, 1.442695
    %v796 = vpow.pop %v795
    %v797 = vmul.f32 %v755, 1.442695
    %v798 = vpow.pop %v797
    %v799 = vmul.f32 %v756, 1.442695
    %v800 = vpow.pop %v799
    %v801 = vmul.f32 %v757, 1.442695
    %v802 = vpow.pop %v801
    %v803 = vmul.f32 %v758, 1.442695
    %v804 = vpow.pop %v803
    %v805 = vmul.f32 %v759, 1.442695
    %v806 = vpow.pop %v805
    %v807 = vmul.f32 %v760, 1.442695
    %v808 = vpow.pop %v807
    %v809 = vmul.f32 %v761, 1.442695
    %v810 = vpow.pop %v809
    %v811 = vmul.f32 %v762, 1.442695
    %v812 = vpow.pop %v811
    %v813 = vmul.f32 %v763, 1.442695
    %v814 = vpow.pop %v813
    %v815 = vmul.f32 %v764, 1.442695
    %v816 = vpow.pop %v815
    %v817 = vmul.f32 %v765, 1.442695
    %v818 = vpow.pop %v817
    %v819 = vmul.f32 %v766, 1.442695
    %v820 = vpow.pop %v819
    %v821 = vmul.f32 %v767, 1.442695
    %v822 = vpow.pop %v821
    %v823 = vmul.f32 %v768, 1.442695
    %v824 = vpow.pop %v823
    %v825 = vmul.f32 %v769, 1.442695
    %v826 = vpow.pop %v825
    %v827 = vmul.f32 %v770, 1.442695
    %v828 = vpow.pop %v827
    %v829 = vmul.f32 %v771, 1.442695
    %v830 = vpow.pop %v829
    %v831 = vmul.f32 %v772, 1.442695
    %v832 = vpow.pop %v831
    %v833 = vmul.f32 %v773, 1.442695
    %v834 = vpow.pop %v833
    %v835 = vmul.f32 %v774, 1.442695
    %v836 = vpow.pop %v835
    %v837 = vmul.f32 %v775, 1.442695
    %v838 = vpow.pop %v837
    %v839 = vmul.f32 %v776, 1.442695
    %v840 = vpow.pop %v839
    %v841 = vsel %vm617, 1, 0
    %v842 = vsel %vm618, 1, 0
    %v843 = vsel %vm619, 1, 0
    %v844 = vsel %vm620, 1, 0
    %v845 = vsel %vm621, 1, 0
    %v846 = vsel %vm622, 1, 0
    %v847 = vsel %vm623, 1, 0
    %v848 = vsel %vm624, 1, 0
    %v849 = vsel %vm625, 1, 0
    %v850 = vsel %vm626, 1, 0
    %v851 = vsel %vm627, 1, 0
    %v852 = vsel %vm628, 1, 0
    %v853 = vsel %vm629, 1, 0
    %v854 = vsel %vm630, 1, 0
    %v855 = vsel %vm631, 1, 0
    %v856 = vsel %vm632, 1, 0
    %v857 = vsel %vm633, 1, 0
    %v858 = vsel %vm634, 1, 0
    %v859 = vsel %vm635, 1, 0
    %v860 = vsel %vm636, 1, 0
    %v861 = vsel %vm637, 1, 0
    %v862 = vsel %vm638, 1, 0
    %v863 = vsel %vm639, 1, 0
    %v864 = vsel %vm640, 1, 0
    %v865 = vsel %vm641, 1, 0
    %v866 = vsel %vm642, 1, 0
    %v867 = vsel %vm643, 1, 0
    %v868 = vsel %vm644, 1, 0
    %v869 = vsel %vm645, 1, 0
    %v870 = vsel %vm646, 1, 0
    %v871 = vsel %vm647, 1, 0
    %v872 = vsel %vm648, 1, 0
    %v873 = vcvt.s32.f32 %v841
    %v874 = vcvt.s32.f32 %v842
    %v875 = vcvt.s32.f32 %v843
    %v876 = vcvt.s32.f32 %v844
    %v877 = vcvt.s32.f32 %v845
    %v878 = vcvt.s32.f32 %v846
    %v879 = vcvt.s32.f32 %v847
    %v880 = vcvt.s32.f32 %v848
    %v881 = vcvt.s32.f32 %v849
    %v882 = vcvt.s32.f32 %v850
    %v883 = vcvt.s32.f32 %v851
    %v884 = vcvt.s32.f32 %v852
    %v885 = vcvt.s32.f32 %v853
    %v886 = vcvt.s32.f32 %v854
    %v887 = vcvt.s32.f32 %v855
    %v888 = vcvt.s32.f32 %v856
    %v889 = vcvt.s32.f32 %v857
    %v890 = vcvt.s32.f32 %v858
    %v891 = vcvt.s32.f32 %v859
    %v892 = vcvt.s32.f32 %v860
    %v893 = vcvt.s32.f32 %v861
    %v894 = vcvt.s32.f32 %v862
    %v895 = vcvt.s32.f32 %v863
    %v896 = vcvt.s32.f32 %v864
    %v897 = vcvt.s32.f32 %v865
    %v898 = vcvt.s32.f32 %v866
    %v899 = vcvt.s32.f32 %v867
    %v900 = vcvt.s32.f32 %v868
    %v901 = vcvt.s32.f32 %v869
    %v902 = vcvt.s32.f32 %v870
    %v903 = vcvt.s32.f32 %v871
    %v904 = vcvt.s32.f32 %v872
    %v905 = vmul.f32 %v778, %v873
    %v906 = vmul.f32 %v780, %v874
    %v907 = vmul.f32 %v782, %v875
    %v908 = vmul.f32 %v784, %v876
    %v909 = vmul.f32 %v786, %v877
    %v910 = vmul.f32 %v788, %v878
    %v911 = vmul.f32 %v790, %v879
    %v912 = vmul.f32 %v792, %v880
    %v913 = vmul.f32 %v794, %v881
    %v914 = vmul.f32 %v796, %v882
    %v915 = vmul.f32 %v798, %v883
    %v916 = vmul.f32 %v800, %v884
    %v917 = vmul.f32 %v802, %v885
    %v918 = vmul.f32 %v804, %v886
    %v919 = vmul.f32 %v806, %v887
    %v920 = vmul.f32 %v808, %v888
    %v921 = vmul.f32 %v810, %v889
    %v922 = vmul.f32 %v812, %v890
    %v923 = vmul.f32 %v814, %v891
    %v924 = vmul.f32 %v816, %v892
    %v925 = vmul.f32 %v818, %v893
    %v926 = vmul.f32 %v820, %v894
    %v927 = vmul.f32 %v822, %v895
    %v928 = vmul.f32 %v824, %v896
    %v929 = vmul.f32 %v826, %v897
    %v930 = vmul.f32 %v828, %v898
    %v931 = vmul.f32 %v830, %v899
    %v932 = vmul.f32 %v832, %v900
    %v933 = vmul.f32 %v834, %v901
    %v934 = vmul.f32 %v836, %v902
    %v935 = vmul.f32 %v838, %v903
    %v936 = vmul.f32 %v840, %v904
    %937 = vadd.xlane.f32.xlu0 %v905
    %v938 = vpop.xlane.xlu0 %937
    %939 = vadd.xlane.f32.xlu0 %v906
    %v940 = vpop.xlane.xlu0 %939
    %941 = vadd.xlane.f32.xlu0 %v907
    %v942 = vpop.xlane.xlu0 %941
    %943 = vadd.xlane.f32.xlu0 %v908
    %v944 = vpop.xlane.xlu0 %943
    %945 = vadd.xlane.f32.xlu0 %v909
    %v946 = vpop.xlane.xlu0 %945
    %947 = vadd.xlane.f32.xlu0 %v910
    %v948 = vpop.xlane.xlu0 %947
    %949 = vadd.xlane.f32.xlu0 %v911
    %v950 = vpop.xlane.xlu0 %949
    %951 = vadd.xlane.f32.xlu0 %v912
    %v952 = vpop.xlane.xlu0 %951
    %953 = vadd.xlane.f32.xlu0 %v913
    %v954 = vpop.xlane.xlu0 %953
    %955 = vadd.xlane.f32.xlu0 %v914
    %v956 = vpop.xlane.xlu0 %955
    %957 = vadd.xlane.f32.xlu0 %v915
    %v958 = vpop.xlane.xlu0 %957
    %959 = vadd.xlane.f32.xlu0 %v916
    %v960 = vpop.xlane.xlu0 %959
    %961 = vadd.xlane.f32.xlu0 %v917
    %v962 = vpop.xlane.xlu0 %961
    %963 = vadd.xlane.f32.xlu0 %v918
    %v964 = vpop.xlane.xlu0 %963
    %965 = vadd.xlane.f32.xlu0 %v919
    %v966 = vpop.xlane.xlu0 %965
    %967 = vadd.xlane.f32.xlu0 %v920
    %v968 = vpop.xlane.xlu0 %967
    %969 = vadd.xlane.f32.xlu0 %v921
    %v970 = vpop.xlane.xlu0 %969
    %971 = vadd.xlane.f32.xlu0 %v922
    %v972 = vpop.xlane.xlu0 %971
    %973 = vadd.xlane.f32.xlu0 %v923
    %v974 = vpop.xlane.xlu0 %973
    %975 = vadd.xlane.f32.xlu0 %v924
    %v976 = vpop.xlane.xlu0 %975
    %977 = vadd.xlane.f32.xlu0 %v925
    %v978 = vpop.xlane.xlu0 %977
    %979 = vadd.xlane.f32.xlu0 %v926
    %v980 = vpop.xlane.xlu0 %979
    %981 = vadd.xlane.f32.xlu0 %v927
    %v982 = vpop.xlane.xlu0 %981
    %983 = vadd.xlane.f32.xlu0 %v928
    %v984 = vpop.xlane.xlu0 %983
    %985 = vadd.xlane.f32.xlu0 %v929
    %v986 = vpop.xlane.xlu0 %985
    %987 = vadd.xlane.f32.xlu0 %v930
    %v988 = vpop.xlane.xlu0 %987
    %989 = vadd.xlane.f32.xlu0 %v931
    %v990 = vpop.xlane.xlu0 %989
    %991 = vadd.xlane.f32.xlu0 %v932
    %v992 = vpop.xlane.xlu0 %991
    %993 = vadd.xlane.f32.xlu0 %v933
    %v994 = vpop.xlane.xlu0 %993
    %995 = vadd.xlane.f32.xlu0 %v934
    %v996 = vpop.xlane.xlu0 %995
    %997 = vadd.xlane.f32.xlu0 %v935
    %v998 = vpop.xlane.xlu0 %997
    %999 = vadd.xlane.f32.xlu0 %v936
    %v1000 = vpop.xlane.xlu0 %999
    %vm1001 = vcmp.eq.f32.partialorder %v938, 0.0
    %vm1002 = vcmp.eq.f32.partialorder %v940, 0.0
    %vm1003 = vcmp.eq.f32.partialorder %v942, 0.0
    %vm1004 = vcmp.eq.f32.partialorder %v944, 0.0
    %vm1005 = vcmp.eq.f32.partialorder %v946, 0.0
    %vm1006 = vcmp.eq.f32.partialorder %v948, 0.0
    %vm1007 = vcmp.eq.f32.partialorder %v950, 0.0
    %vm1008 = vcmp.eq.f32.partialorder %v952, 0.0
    %vm1009 = vcmp.eq.f32.partialorder %v954, 0.0
    %vm1010 = vcmp.eq.f32.partialorder %v956, 0.0
    %vm1011 = vcmp.eq.f32.partialorder %v958, 0.0
    %vm1012 = vcmp.eq.f32.partialorder %v960, 0.0
    %vm1013 = vcmp.eq.f32.partialorder %v962, 0.0
    %vm1014 = vcmp.eq.f32.partialorder %v964, 0.0
    %vm1015 = vcmp.eq.f32.partialorder %v966, 0.0
    %vm1016 = vcmp.eq.f32.partialorder %v968, 0.0
    %vm1017 = vcmp.eq.f32.partialorder %v970, 0.0
    %vm1018 = vcmp.eq.f32.partialorder %v972, 0.0
    %vm1019 = vcmp.eq.f32.partialorder %v974, 0.0
    %vm1020 = vcmp.eq.f32.partialorder %v976, 0.0
    %vm1021 = vcmp.eq.f32.partialorder %v978, 0.0
    %vm1022 = vcmp.eq.f32.partialorder %v980, 0.0
    %vm1023 = vcmp.eq.f32.partialorder %v982, 0.0
    %vm1024 = vcmp.eq.f32.partialorder %v984, 0.0
    %vm1025 = vcmp.eq.f32.partialorder %v986, 0.0
    %vm1026 = vcmp.eq.f32.partialorder %v988, 0.0
    %vm1027 = vcmp.eq.f32.partialorder %v990, 0.0
    %vm1028 = vcmp.eq.f32.partialorder %v992, 0.0
    %vm1029 = vcmp.eq.f32.partialorder %v994, 0.0
    %vm1030 = vcmp.eq.f32.partialorder %v996, 0.0
    %vm1031 = vcmp.eq.f32.partialorder %v998, 0.0
    %vm1032 = vcmp.eq.f32.partialorder %v1000, 0.0
    %v1033 = vsel %vm1001, 1.0, %v938
    %v1034 = vsel %vm1002, 1.0, %v940
    %v1035 = vsel %vm1003, 1.0, %v942
    %v1036 = vsel %vm1004, 1.0, %v944
    %v1037 = vsel %vm1005, 1.0, %v946
    %v1038 = vsel %vm1006, 1.0, %v948
    %v1039 = vsel %vm1007, 1.0, %v950
    %v1040 = vsel %vm1008, 1.0, %v952
    %v1041 = vsel %vm1009, 1.0, %v954
    %v1042 = vsel %vm1010, 1.0, %v956
    %v1043 = vsel %vm1011, 1.0, %v958
    %v1044 = vsel %vm1012, 1.0, %v960
    %v1045 = vsel %vm1013, 1.0, %v962
    %v1046 = vsel %vm1014, 1.0, %v964
    %v1047 = vsel %vm1015, 1.0, %v966
    %v1048 = vsel %vm1016, 1.0, %v968
    %v1049 = vsel %vm1017, 1.0, %v970
    %v1050 = vsel %vm1018, 1.0, %v972
    %v1051 = vsel %vm1019, 1.0, %v974
    %v1052 = vsel %vm1020, 1.0, %v976
    %v1053 = vsel %vm1021, 1.0, %v978
    %v1054 = vsel %vm1022, 1.0, %v980
    %v1055 = vsel %vm1023, 1.0, %v982
    %v1056 = vsel %vm1024, 1.0, %v984
    %v1057 = vsel %vm1025, 1.0, %v986
    %v1058 = vsel %vm1026, 1.0, %v988
    %v1059 = vsel %vm1027, 1.0, %v990
    %v1060 = vsel %vm1028, 1.0, %v992
    %v1061 = vsel %vm1029, 1.0, %v994
    %v1062 = vsel %vm1030, 1.0, %v996
    %v1063 = vsel %vm1031, 1.0, %v998
    %v1064 = vsel %vm1032, 1.0, %v1000
    %v1065 = vrcp.pop %v1033
    %v1066 = vmul.f32 %v1033, %v1065
    %v1067 = vsub.f32 1.0, %v1066
    %v1068 = vmul.f32 %v1065, %v1067
    %v1069 = vadd.f32 %v1065, %v1068
    %vm1070 = vweird.f32 %v1033
    %vm1071 = vweird.f32 %v1065
    %vm1072 = vmor %vm1070, %vm1071
    %v1073 = vsel %vm1072, %v1065, %v1069
    %v1074 = vand.u32 2147483647, %v1033
    %vm1075 = vcmp.eq.f32.partialorder %v1074, 8.507059e+37
    %v1076 = vand.u32 %v1033, 2147483648
    %v1077 = vor.u32 1.1754944e-38, %v1076
    %v1078 = vsel %vm1075, %v1077, %v1073
    %v1079 = vrcp.pop %v1034
    %v1080 = vmul.f32 %v1034, %v1079
    %v1081 = vsub.f32 1.0, %v1080
    %v1082 = vmul.f32 %v1079, %v1081
    %v1083 = vadd.f32 %v1079, %v1082
    %vm1084 = vweird.f32 %v1034
    %vm1085 = vweird.f32 %v1079
    %vm1086 = vmor %vm1084, %vm1085
    %v1087 = vsel %vm1086, %v1079, %v1083
    %v1088 = vand.u32 2147483647, %v1034
    %vm1089 = vcmp.eq.f32.partialorder %v1088, 8.507059e+37
    %v1090 = vand.u32 %v1034, 2147483648
    %v1091 = vor.u32 1.1754944e-38, %v1090
    %v1092 = vsel %vm1089, %v1091, %v1087
    %v1093 = vrcp.pop %v1035
    %v1094 = vmul.f32 %v1035, %v1093
    %v1095 = vsub.f32 1.0, %v1094
    %v1096 = vmul.f32 %v1093, %v1095
    %v1097 = vadd.f32 %v1093, %v1096
    %vm1098 = vweird.f32 %v1035
    %vm1099 = vweird.f32 %v1093
    %vm1100 = vmor %vm1098, %vm1099
    %v1101 = vsel %vm1100, %v1093, %v1097
    %v1102 = vand.u32 2147483647, %v1035
    %vm1103 = vcmp.eq.f32.partialorder %v1102, 8.507059e+37
    %v1104 = vand.u32 %v1035, 2147483648
    %v1105 = vor.u32 1.1754944e-38, %v1104
    %v1106 = vsel %vm1103, %v1105, %v1101
    %v1107 = vrcp.pop %v1036
    %v1108 = vmul.f32 %v1036, %v1107
    %v1109 = vsub.f32 1.0, %v1108
    %v1110 = vmul.f32 %v1107, %v1109
    %v1111 = vadd.f32 %v1107, %v1110
    %vm1112 = vweird.f32 %v1036
    %vm1113 = vweird.f32 %v1107
    %vm1114 = vmor %vm1112, %vm1113
    %v1115 = vsel %vm1114, %v1107, %v1111
    %v1116 = vand.u32 2147483647, %v1036
    %vm1117 = vcmp.eq.f32.partialorder %v1116, 8.507059e+37
    %v1118 = vand.u32 %v1036, 2147483648
    %v1119 = vor.u32 1.1754944e-38, %v1118
    %v1120 = vsel %vm1117, %v1119, %v1115
    %v1121 = vrcp.pop %v1037
    %v1122 = vmul.f32 %v1037, %v1121
    %v1123 = vsub.f32 1.0, %v1122
    %v1124 = vmul.f32 %v1121, %v1123
    %v1125 = vadd.f32 %v1121, %v1124
    %vm1126 = vweird.f32 %v1037
    %vm1127 = vweird.f32 %v1121
    %vm1128 = vmor %vm1126, %vm1127
    %v1129 = vsel %vm1128, %v1121, %v1125
    %v1130 = vand.u32 2147483647, %v1037
    %vm1131 = vcmp.eq.f32.partialorder %v1130, 8.507059e+37
    %v1132 = vand.u32 %v1037, 2147483648
    %v1133 = vor.u32 1.1754944e-38, %v1132
    %v1134 = vsel %vm1131, %v1133, %v1129
    %v1135 = vrcp.pop %v1038
    %v1136 = vmul.f32 %v1038, %v1135
    %v1137 = vsub.f32 1.0, %v1136
    %v1138 = vmul.f32 %v1135, %v1137
    %v1139 = vadd.f32 %v1135, %v1138
    %vm1140 = vweird.f32 %v1038
    %vm1141 = vweird.f32 %v1135
    %vm1142 = vmor %vm1140, %vm1141
    %v1143 = vsel %vm1142, %v1135, %v1139
    %v1144 = vand.u32 2147483647, %v1038
    %vm1145 = vcmp.eq.f32.partialorder %v1144, 8.507059e+37
    %v1146 = vand.u32 %v1038, 2147483648
    %v1147 = vor.u32 1.1754944e-38, %v1146
    %v1148 = vsel %vm1145, %v1147, %v1143
    %v1149 = vrcp.pop %v1039
    %v1150 = vmul.f32 %v1039, %v1149
    %v1151 = vsub.f32 1.0, %v1150
    %v1152 = vmul.f32 %v1149, %v1151
    %v1153 = vadd.f32 %v1149, %v1152
    %vm1154 = vweird.f32 %v1039
    %vm1155 = vweird.f32 %v1149
    %vm1156 = vmor %vm1154, %vm1155
    %v1157 = vsel %vm1156, %v1149, %v1153
    %v1158 = vand.u32 2147483647, %v1039
    %vm1159 = vcmp.eq.f32.partialorder %v1158, 8.507059e+37
    %v1160 = vand.u32 %v1039, 2147483648
    %v1161 = vor.u32 1.1754944e-38, %v1160
    %v1162 = vsel %vm1159, %v1161, %v1157
    %v1163 = vrcp.pop %v1040
    %v1164 = vmul.f32 %v1040, %v1163
    %v1165 = vsub.f32 1.0, %v1164
    %v1166 = vmul.f32 %v1163, %v1165
    %v1167 = vadd.f32 %v1163, %v1166
    %vm1168 = vweird.f32 %v1040
    %vm1169 = vweird.f32 %v1163
    %vm1170 = vmor %vm1168, %vm1169
    %v1171 = vsel %vm1170, %v1163, %v1167
    %v1172 = vand.u32 2147483647, %v1040
    %vm1173 = vcmp.eq.f32.partialorder %v1172, 8.507059e+37
    %v1174 = vand.u32 %v1040, 2147483648
    %v1175 = vor.u32 1.1754944e-38, %v1174
    %v1176 = vsel %vm1173, %v1175, %v1171
    %v1177 = vrcp.pop %v1041
    %v1178 = vmul.f32 %v1041, %v1177
    %v1179 = vsub.f32 1.0, %v1178
    %v1180 = vmul.f32 %v1177, %v1179
    %v1181 = vadd.f32 %v1177, %v1180
    %vm1182 = vweird.f32 %v1041
    %vm1183 = vweird.f32 %v1177
    %vm1184 = vmor %vm1182, %vm1183
    %v1185 = vsel %vm1184, %v1177, %v1181
    %v1186 = vand.u32 2147483647, %v1041
    %vm1187 = vcmp.eq.f32.partialorder %v1186, 8.507059e+37
    %v1188 = vand.u32 %v1041, 2147483648
    %v1189 = vor.u32 1.1754944e-38, %v1188
    %v1190 = vsel %vm1187, %v1189, %v1185
    %v1191 = vrcp.pop %v1042
    %v1192 = vmul.f32 %v1042, %v1191
    %v1193 = vsub.f32 1.0, %v1192
    %v1194 = vmul.f32 %v1191, %v1193
    %v1195 = vadd.f32 %v1191, %v1194
    %vm1196 = vweird.f32 %v1042
    %vm1197 = vweird.f32 %v1191
    %vm1198 = vmor %vm1196, %vm1197
    %v1199 = vsel %vm1198, %v1191, %v1195
    %v1200 = vand.u32 2147483647, %v1042
    %vm1201 = vcmp.eq.f32.partialorder %v1200, 8.507059e+37
    %v1202 = vand.u32 %v1042, 2147483648
    %v1203 = vor.u32 1.1754944e-38, %v1202
    %v1204 = vsel %vm1201, %v1203, %v1199
    %v1205 = vrcp.pop %v1043
    %v1206 = vmul.f32 %v1043, %v1205
    %v1207 = vsub.f32 1.0, %v1206
    %v1208 = vmul.f32 %v1205, %v1207
    %v1209 = vadd.f32 %v1205, %v1208
    %vm1210 = vweird.f32 %v1043
    %vm1211 = vweird.f32 %v1205
    %vm1212 = vmor %vm1210, %vm1211
    %v1213 = vsel %vm1212, %v1205, %v1209
    %v1214 = vand.u32 2147483647, %v1043
    %vm1215 = vcmp.eq.f32.partialorder %v1214, 8.507059e+37
    %v1216 = vand.u32 %v1043, 2147483648
    %v1217 = vor.u32 1.1754944e-38, %v1216
    %v1218 = vsel %vm1215, %v1217, %v1213
    %v1219 = vrcp.pop %v1044
    %v1220 = vmul.f32 %v1044, %v1219
    %v1221 = vsub.f32 1.0, %v1220
    %v1222 = vmul.f32 %v1219, %v1221
    %v1223 = vadd.f32 %v1219, %v1222
    %vm1224 = vweird.f32 %v1044
    %vm1225 = vweird.f32 %v1219
    %vm1226 = vmor %vm1224, %vm1225
    %v1227 = vsel %vm1226, %v1219, %v1223
    %v1228 = vand.u32 2147483647, %v1044
    %vm1229 = vcmp.eq.f32.partialorder %v1228, 8.507059e+37
    %v1230 = vand.u32 %v1044, 2147483648
    %v1231 = vor.u32 1.1754944e-38, %v1230
    %v1232 = vsel %vm1229, %v1231, %v1227
    %v1233 = vrcp.pop %v1045
    %v1234 = vmul.f32 %v1045, %v1233
    %v1235 = vsub.f32 1.0, %v1234
    %v1236 = vmul.f32 %v1233, %v1235
    %v1237 = vadd.f32 %v1233, %v1236
    %vm1238 = vweird.f32 %v1045
    %vm1239 = vweird.f32 %v1233
    %vm1240 = vmor %vm1238, %vm1239
    %v1241 = vsel %vm1240, %v1233, %v1237
    %v1242 = vand.u32 2147483647, %v1045
    %vm1243 = vcmp.eq.f32.partialorder %v1242, 8.507059e+37
    %v1244 = vand.u32 %v1045, 2147483648
    %v1245 = vor.u32 1.1754944e-38, %v1244
    %v1246 = vsel %vm1243, %v1245, %v1241
    %v1247 = vrcp.pop %v1046
    %v1248 = vmul.f32 %v1046, %v1247
    %v1249 = vsub.f32 1.0, %v1248
    %v1250 = vmul.f32 %v1247, %v1249
    %v1251 = vadd.f32 %v1247, %v1250
    %vm1252 = vweird.f32 %v1046
    %vm1253 = vweird.f32 %v1247
    %vm1254 = vmor %vm1252, %vm1253
    %v1255 = vsel %vm1254, %v1247, %v1251
    %v1256 = vand.u32 2147483647, %v1046
    %vm1257 = vcmp.eq.f32.partialorder %v1256, 8.507059e+37
    %v1258 = vand.u32 %v1046, 2147483648
    %v1259 = vor.u32 1.1754944e-38, %v1258
    %v1260 = vsel %vm1257, %v1259, %v1255
    %v1261 = vrcp.pop %v1047
    %v1262 = vmul.f32 %v1047, %v1261
    %v1263 = vsub.f32 1.0, %v1262
    %v1264 = vmul.f32 %v1261, %v1263
    %v1265 = vadd.f32 %v1261, %v1264
    %vm1266 = vweird.f32 %v1047
    %vm1267 = vweird.f32 %v1261
    %vm1268 = vmor %vm1266, %vm1267
    %v1269 = vsel %vm1268, %v1261, %v1265
    %v1270 = vand.u32 2147483647, %v1047
    %vm1271 = vcmp.eq.f32.partialorder %v1270, 8.507059e+37
    %v1272 = vand.u32 %v1047, 2147483648
    %v1273 = vor.u32 1.1754944e-38, %v1272
    %v1274 = vsel %vm1271, %v1273, %v1269
    %v1275 = vrcp.pop %v1048
    %v1276 = vmul.f32 %v1048, %v1275
    %v1277 = vsub.f32 1.0, %v1276
    %v1278 = vmul.f32 %v1275, %v1277
    %v1279 = vadd.f32 %v1275, %v1278
    %vm1280 = vweird.f32 %v1048
    %vm1281 = vweird.f32 %v1275
    %vm1282 = vmor %vm1280, %vm1281
    %v1283 = vsel %vm1282, %v1275, %v1279
    %v1284 = vand.u32 2147483647, %v1048
    %vm1285 = vcmp.eq.f32.partialorder %v1284, 8.507059e+37
    %v1286 = vand.u32 %v1048, 2147483648
    %v1287 = vor.u32 1.1754944e-38, %v1286
    %v1288 = vsel %vm1285, %v1287, %v1283
    %v1289 = vrcp.pop %v1049
    %v1290 = vmul.f32 %v1049, %v1289
    %v1291 = vsub.f32 1.0, %v1290
    %v1292 = vmul.f32 %v1289, %v1291
    %v1293 = vadd.f32 %v1289, %v1292
    %vm1294 = vweird.f32 %v1049
    %vm1295 = vweird.f32 %v1289
    %vm1296 = vmor %vm1294, %vm1295
    %v1297 = vsel %vm1296, %v1289, %v1293
    %v1298 = vand.u32 2147483647, %v1049
    %vm1299 = vcmp.eq.f32.partialorder %v1298, 8.507059e+37
    %v1300 = vand.u32 %v1049, 2147483648
    %v1301 = vor.u32 1.1754944e-38, %v1300
    %v1302 = vsel %vm1299, %v1301, %v1297
    %v1303 = vrcp.pop %v1050
    %v1304 = vmul.f32 %v1050, %v1303
    %v1305 = vsub.f32 1.0, %v1304
    %v1306 = vmul.f32 %v1303, %v1305
    %v1307 = vadd.f32 %v1303, %v1306
    %vm1308 = vweird.f32 %v1050
    %vm1309 = vweird.f32 %v1303
    %vm1310 = vmor %vm1308, %vm1309
    %v1311 = vsel %vm1310, %v1303, %v1307
    %v1312 = vand.u32 2147483647, %v1050
    %vm1313 = vcmp.eq.f32.partialorder %v1312, 8.507059e+37
    %v1314 = vand.u32 %v1050, 2147483648
    %v1315 = vor.u32 1.1754944e-38, %v1314
    %v1316 = vsel %vm1313, %v1315, %v1311
    %v1317 = vrcp.pop %v1051
    %v1318 = vmul.f32 %v1051, %v1317
    %v1319 = vsub.f32 1.0, %v1318
    %v1320 = vmul.f32 %v1317, %v1319
    %v1321 = vadd.f32 %v1317, %v1320
    %vm1322 = vweird.f32 %v1051
    %vm1323 = vweird.f32 %v1317
    %vm1324 = vmor %vm1322, %vm1323
    %v1325 = vsel %vm1324, %v1317, %v1321
    %v1326 = vand.u32 2147483647, %v1051
    %vm1327 = vcmp.eq.f32.partialorder %v1326, 8.507059e+37
    %v1328 = vand.u32 %v1051, 2147483648
    %v1329 = vor.u32 1.1754944e-38, %v1328
    %v1330 = vsel %vm1327, %v1329, %v1325
    %v1331 = vrcp.pop %v1052
    %v1332 = vmul.f32 %v1052, %v1331
    %v1333 = vsub.f32 1.0, %v1332
    %v1334 = vmul.f32 %v1331, %v1333
    %v1335 = vadd.f32 %v1331, %v1334
    %vm1336 = vweird.f32 %v1052
    %vm1337 = vweird.f32 %v1331
    %vm1338 = vmor %vm1336, %vm1337
    %v1339 = vsel %vm1338, %v1331, %v1335
    %v1340 = vand.u32 2147483647, %v1052
    %vm1341 = vcmp.eq.f32.partialorder %v1340, 8.507059e+37
    %v1342 = vand.u32 %v1052, 2147483648
    %v1343 = vor.u32 1.1754944e-38, %v1342
    %v1344 = vsel %vm1341, %v1343, %v1339
    %v1345 = vrcp.pop %v1053
    %v1346 = vmul.f32 %v1053, %v1345
    %v1347 = vsub.f32 1.0, %v1346
    %v1348 = vmul.f32 %v1345, %v1347
    %v1349 = vadd.f32 %v1345, %v1348
    %vm1350 = vweird.f32 %v1053
    %vm1351 = vweird.f32 %v1345
    %vm1352 = vmor %vm1350, %vm1351
    %v1353 = vsel %vm1352, %v1345, %v1349
    %v1354 = vand.u32 2147483647, %v1053
    %vm1355 = vcmp.eq.f32.partialorder %v1354, 8.507059e+37
    %v1356 = vand.u32 %v1053, 2147483648
    %v1357 = vor.u32 1.1754944e-38, %v1356
    %v1358 = vsel %vm1355, %v1357, %v1353
    %v1359 = vrcp.pop %v1054
    %v1360 = vmul.f32 %v1054, %v1359
    %v1361 = vsub.f32 1.0, %v1360
    %v1362 = vmul.f32 %v1359, %v1361
    %v1363 = vadd.f32 %v1359, %v1362
    %vm1364 = vweird.f32 %v1054
    %vm1365 = vweird.f32 %v1359
    %vm1366 = vmor %vm1364, %vm1365
    %v1367 = vsel %vm1366, %v1359, %v1363
    %v1368 = vand.u32 2147483647, %v1054
    %vm1369 = vcmp.eq.f32.partialorder %v1368, 8.507059e+37
    %v1370 = vand.u32 %v1054, 2147483648
    %v1371 = vor.u32 1.1754944e-38, %v1370
    %v1372 = vsel %vm1369, %v1371, %v1367
    %v1373 = vrcp.pop %v1055
    %v1374 = vmul.f32 %v1055, %v1373
    %v1375 = vsub.f32 1.0, %v1374
    %v1376 = vmul.f32 %v1373, %v1375
    %v1377 = vadd.f32 %v1373, %v1376
    %vm1378 = vweird.f32 %v1055
    %vm1379 = vweird.f32 %v1373
    %vm1380 = vmor %vm1378, %vm1379
    %v1381 = vsel %vm1380, %v1373, %v1377
    %v1382 = vand.u32 2147483647, %v1055
    %vm1383 = vcmp.eq.f32.partialorder %v1382, 8.507059e+37
    %v1384 = vand.u32 %v1055, 2147483648
    %v1385 = vor.u32 1.1754944e-38, %v1384
    %v1386 = vsel %vm1383, %v1385, %v1381
    %v1387 = vrcp.pop %v1056
    %v1388 = vmul.f32 %v1056, %v1387
    %v1389 = vsub.f32 1.0, %v1388
    %v1390 = vmul.f32 %v1387, %v1389
    %v1391 = vadd.f32 %v1387, %v1390
    %vm1392 = vweird.f32 %v1056
    %vm1393 = vweird.f32 %v1387
    %vm1394 = vmor %vm1392, %vm1393
    %v1395 = vsel %vm1394, %v1387, %v1391
    %v1396 = vand.u32 2147483647, %v1056
    %vm1397 = vcmp.eq.f32.partialorder %v1396, 8.507059e+37
    %v1398 = vand.u32 %v1056, 2147483648
    %v1399 = vor.u32 1.1754944e-38, %v1398
    %v1400 = vsel %vm1397, %v1399, %v1395
    %v1401 = vrcp.pop %v1057
    %v1402 = vmul.f32 %v1057, %v1401
    %v1403 = vsub.f32 1.0, %v1402
    %v1404 = vmul.f32 %v1401, %v1403
    %v1405 = vadd.f32 %v1401, %v1404
    %vm1406 = vweird.f32 %v1057
    %vm1407 = vweird.f32 %v1401
    %vm1408 = vmor %vm1406, %vm1407
    %v1409 = vsel %vm1408, %v1401, %v1405
    %v1410 = vand.u32 2147483647, %v1057
    %vm1411 = vcmp.eq.f32.partialorder %v1410, 8.507059e+37
    %v1412 = vand.u32 %v1057, 2147483648
    %v1413 = vor.u32 1.1754944e-38, %v1412
    %v1414 = vsel %vm1411, %v1413, %v1409
    %v1415 = vrcp.pop %v1058
    %v1416 = vmul.f32 %v1058, %v1415
    %v1417 = vsub.f32 1.0, %v1416
    %v1418 = vmul.f32 %v1415, %v1417
    %v1419 = vadd.f32 %v1415, %v1418
    %vm1420 = vweird.f32 %v1058
    %vm1421 = vweird.f32 %v1415
    %vm1422 = vmor %vm1420, %vm1421
    %v1423 = vsel %vm1422, %v1415, %v1419
    %v1424 = vand.u32 2147483647, %v1058
    %vm1425 = vcmp.eq.f32.partialorder %v1424, 8.507059e+37
    %v1426 = vand.u32 %v1058, 2147483648
    %v1427 = vor.u32 1.1754944e-38, %v1426
    %v1428 = vsel %vm1425, %v1427, %v1423
    %v1429 = vrcp.pop %v1059
    %v1430 = vmul.f32 %v1059, %v1429
    %v1431 = vsub.f32 1.0, %v1430
    %v1432 = vmul.f32 %v1429, %v1431
    %v1433 = vadd.f32 %v1429, %v1432
    %vm1434 = vweird.f32 %v1059
    %vm1435 = vweird.f32 %v1429
    %vm1436 = vmor %vm1434, %vm1435
    %v1437 = vsel %vm1436, %v1429, %v1433
    %v1438 = vand.u32 2147483647, %v1059
    %vm1439 = vcmp.eq.f32.partialorder %v1438, 8.507059e+37
    %v1440 = vand.u32 %v1059, 2147483648
    %v1441 = vor.u32 1.1754944e-38, %v1440
    %v1442 = vsel %vm1439, %v1441, %v1437
    %v1443 = vrcp.pop %v1060
    %v1444 = vmul.f32 %v1060, %v1443
    %v1445 = vsub.f32 1.0, %v1444
    %v1446 = vmul.f32 %v1443, %v1445
    %v1447 = vadd.f32 %v1443, %v1446
    %vm1448 = vweird.f32 %v1060
    %vm1449 = vweird.f32 %v1443
    %vm1450 = vmor %vm1448, %vm1449
    %v1451 = vsel %vm1450, %v1443, %v1447
    %v1452 = vand.u32 2147483647, %v1060
    %vm1453 = vcmp.eq.f32.partialorder %v1452, 8.507059e+37
    %v1454 = vand.u32 %v1060, 2147483648
    %v1455 = vor.u32 1.1754944e-38, %v1454
    %v1456 = vsel %vm1453, %v1455, %v1451
    %v1457 = vrcp.pop %v1061
    %v1458 = vmul.f32 %v1061, %v1457
    %v1459 = vsub.f32 1.0, %v1458
    %v1460 = vmul.f32 %v1457, %v1459
    %v1461 = vadd.f32 %v1457, %v1460
    %vm1462 = vweird.f32 %v1061
    %vm1463 = vweird.f32 %v1457
    %vm1464 = vmor %vm1462, %vm1463
    %v1465 = vsel %vm1464, %v1457, %v1461
    %v1466 = vand.u32 2147483647, %v1061
    %vm1467 = vcmp.eq.f32.partialorder %v1466, 8.507059e+37
    %v1468 = vand.u32 %v1061, 2147483648
    %v1469 = vor.u32 1.1754944e-38, %v1468
    %v1470 = vsel %vm1467, %v1469, %v1465
    %v1471 = vrcp.pop %v1062
    %v1472 = vmul.f32 %v1062, %v1471
    %v1473 = vsub.f32 1.0, %v1472
    %v1474 = vmul.f32 %v1471, %v1473
    %v1475 = vadd.f32 %v1471, %v1474
    %vm1476 = vweird.f32 %v1062
    %vm1477 = vweird.f32 %v1471
    %vm1478 = vmor %vm1476, %vm1477
    %v1479 = vsel %vm1478, %v1471, %v1475
    %v1480 = vand.u32 2147483647, %v1062
    %vm1481 = vcmp.eq.f32.partialorder %v1480, 8.507059e+37
    %v1482 = vand.u32 %v1062, 2147483648
    %v1483 = vor.u32 1.1754944e-38, %v1482
    %v1484 = vsel %vm1481, %v1483, %v1479
    %v1485 = vrcp.pop %v1063
    %v1486 = vmul.f32 %v1063, %v1485
    %v1487 = vsub.f32 1.0, %v1486
    %v1488 = vmul.f32 %v1485, %v1487
    %v1489 = vadd.f32 %v1485, %v1488
    %vm1490 = vweird.f32 %v1063
    %vm1491 = vweird.f32 %v1485
    %vm1492 = vmor %vm1490, %vm1491
    %v1493 = vsel %vm1492, %v1485, %v1489
    %v1494 = vand.u32 2147483647, %v1063
    %vm1495 = vcmp.eq.f32.partialorder %v1494, 8.507059e+37
    %v1496 = vand.u32 %v1063, 2147483648
    %v1497 = vor.u32 1.1754944e-38, %v1496
    %v1498 = vsel %vm1495, %v1497, %v1493
    %v1499 = vrcp.pop %v1064
    %v1500 = vmul.f32 %v1064, %v1499
    %v1501 = vsub.f32 1.0, %v1500
    %v1502 = vmul.f32 %v1499, %v1501
    %v1503 = vadd.f32 %v1499, %v1502
    %vm1504 = vweird.f32 %v1064
    %vm1505 = vweird.f32 %v1499
    %vm1506 = vmor %vm1504, %vm1505
    %v1507 = vsel %vm1506, %v1499, %v1503
    %v1508 = vand.u32 2147483647, %v1064
    %vm1509 = vcmp.eq.f32.partialorder %v1508, 8.507059e+37
    %v1510 = vand.u32 %v1064, 2147483648
    %v1511 = vor.u32 1.1754944e-38, %v1510
    %v1512 = vsel %vm1509, %v1511, %v1507
    %v1513 = vmul.f32 %v905, %v1078
    %v1514 = vmul.f32 %v906, %v1092
    %v1515 = vmul.f32 %v907, %v1106
    %v1516 = vmul.f32 %v908, %v1120
    %v1517 = vmul.f32 %v909, %v1134
    %v1518 = vmul.f32 %v910, %v1148
    %v1519 = vmul.f32 %v911, %v1162
    %v1520 = vmul.f32 %v912, %v1176
    %v1521 = vmul.f32 %v913, %v1190
    %v1522 = vmul.f32 %v914, %v1204
    %v1523 = vmul.f32 %v915, %v1218
    %v1524 = vmul.f32 %v916, %v1232
    %v1525 = vmul.f32 %v917, %v1246
    %v1526 = vmul.f32 %v918, %v1260
    %v1527 = vmul.f32 %v919, %v1274
    %v1528 = vmul.f32 %v920, %v1288
    %v1529 = vmul.f32 %v921, %v1302
    %v1530 = vmul.f32 %v922, %v1316
    %v1531 = vmul.f32 %v923, %v1330
    %v1532 = vmul.f32 %v924, %v1344
    %v1533 = vmul.f32 %v925, %v1358
    %v1534 = vmul.f32 %v926, %v1372
    %v1535 = vmul.f32 %v927, %v1386
    %v1536 = vmul.f32 %v928, %v1400
    %v1537 = vmul.f32 %v929, %v1414
    %v1538 = vmul.f32 %v930, %v1428
    %v1539 = vmul.f32 %v931, %v1442
    %v1540 = vmul.f32 %v932, %v1456
    %v1541 = vmul.f32 %v933, %v1470
    %v1542 = vmul.f32 %v934, %v1484
    %v1543 = vmul.f32 %v935, %v1498
    %v1544 = vmul.f32 %v936, %v1512
    %1545 = vst [vmem:[#allocation7] sm:$0xff] %v1513
    %1546 = vst [vmem:[#allocation7 + $0x8] sm:$0xff] %v1514
    %1547 = vst [vmem:[#allocation7 + $0x10] sm:$0xff] %v1515
    %1548 = vst [vmem:[#allocation7 + $0x18] sm:$0xff] %v1516
    %1549 = vst [vmem:[#allocation7 + $0x20] sm:$0xff] %v1517
    %1550 = vst [vmem:[#allocation7 + $0x28] sm:$0xff] %v1518
    %1551 = vst [vmem:[#allocation7 + $0x30] sm:$0xff] %v1519
    %1552 = vst [vmem:[#allocation7 + $0x38] sm:$0xff] %v1520
    %1553 = vst [vmem:[#allocation7 + $0x40] sm:$0xff] %v1521
    %1554 = vst [vmem:[#allocation7 + $0x48] sm:$0xff] %v1522
    %1555 = vst [vmem:[#allocation7 + $0x50] sm:$0xff] %v1523
    %1556 = vst [vmem:[#allocation7 + $0x58] sm:$0xff] %v1524
    %1557 = vst [vmem:[#allocation7 + $0x60] sm:$0xff] %v1525
    %1558 = vst [vmem:[#allocation7 + $0x68] sm:$0xff] %v1526
    %1559 = vst [vmem:[#allocation7 + $0x70] sm:$0xff] %v1527
    %1560 = vst [vmem:[#allocation7 + $0x78] sm:$0xff] %v1528
    %1561 = vst [vmem:[#allocation7 + $0x80] sm:$0xff] %v1529
    %1562 = vst [vmem:[#allocation7 + $0x88] sm:$0xff] %v1530
    %1563 = vst [vmem:[#allocation7 + $0x90] sm:$0xff] %v1531
    %1564 = vst [vmem:[#allocation7 + $0x98] sm:$0xff] %v1532
    %1565 = vst [vmem:[#allocation7 + $0xa0] sm:$0xff] %v1533
    %1566 = vst [vmem:[#allocation7 + $0xa8] sm:$0xff] %v1534
    %1567 = vst [vmem:[#allocation7 + $0xb0] sm:$0xff] %v1535
    %1568 = vst [vmem:[#allocation7 + $0xb8] sm:$0xff] %v1536
    %1569 = vst [vmem:[#allocation7 + $0xc0] sm:$0xff] %v1537
    %1570 = vst [vmem:[#allocation7 + $0xc8] sm:$0xff] %v1538
    %1571 = vst [vmem:[#allocation7 + $0xd0] sm:$0xff] %v1539
    %1572 = vst [vmem:[#allocation7 + $0xd8] sm:$0xff] %v1540
    %1573 = vst [vmem:[#allocation7 + $0xe0] sm:$0xff] %v1541
    %1574 = vst [vmem:[#allocation7 + $0xe8] sm:$0xff] %v1542
    %1575 = vst [vmem:[#allocation7 + $0xf0] sm:$0xff] %v1543
    %1576 = vst [vmem:[#allocation7 + $0xf8] sm:$0xff] %v1544
    // Predicated region
    $region22: #{tpu_custom_call.1} parent=1 // pred_check
      _
    $region23: #{tpu_custom_call.1} parent=1 // pred_check_branch
      %1578 = sbr.rel (0) target = $region25
    $region24: #{tpu_custom_call.1} parent=1 // pred_region
      %1580 = vsyncadd [#allocation4], 0
      %s1581 = sshll.u32 [#allocation7], 4
      %s1582 = int_to_ptr.vmem [resolvable:$true] %s1581
      %s1583 = sshll.u32 %s3, 4
      %s1584 = int_to_ptr.hbm [resolvable:$true] %s1583
      %1589 = dma.vmem_to_hbm [thread:$0]  %s1582, 4096, %s1584, [#allocation4], 128, 128, 8
    $region25: #{tpu_custom_call.1} parent=1 // pred_fallthru
      _
    // Predicated region
    $region26: #{tpu_custom_call.1} parent=1 // pred_check
      _
    $region27: #{tpu_custom_call.1} parent=1 // pred_check_branch
      %1591 = sbr.rel (0) target = $region29
    $region28: #{tpu_custom_call.1} parent=1 // pred_region
      %1593 = dma.done [#allocation4], 4096
    $region29: #{tpu_custom_call.1} parent=1 // pred_fallthru
      _
    %1594 = vsyncpa [#allocation3], 1
    %1595 = vsyncpa [#allocation6], 1
    %1596 = vsyncpa [#allocation4], 1

</llo_original>
